<compile_context>
chip_gen: v5e
topology: v5e:2x2
jax: 0.10.0
libtpu: 0.0.40
codegen_flags: <defaults>
</compile_context>

<pallas_src>
import functools
from math import sqrt

import jax
import jax.numpy as jnp
from jax.experimental import pallas as pl
from jax.experimental.pallas import tpu as pltpu

LANE = 128
# Set to jnp.bfloat16 on v6e/v7x for ~2x MXU throughput (accumulation and all
# elementwise math stay fp32). Kept fp32 here to preserve PyTorch numerics.
MXU_DTYPE = jnp.float32


def _round_up(c, m=LANE):
    return ((c + m - 1) // m) * m


def _mm(a, b):
    return jnp.dot(a.astype(MXU_DTYPE), b.astype(MXU_DTYPE),
                   preferred_element_type=jnp.float32)


def _leaky_pixelnorm(y, inv_c):
    # LeakyReLU(0.2) then PixelNorm over the channel (lane) axis.  Padded
    # channels are zero, so summing over the padded width equals summing over
    # the true channels; divide by the TRUE channel count via inv_c.
    y = jnp.maximum(y, 0.2 * y)
    return y * jax.lax.rsqrt(
        jnp.sum(y * y, axis=-1, keepdims=True) * inv_c + 1e-8)


def _upsample2x(x, H, W, C):
    # Nearest-neighbour 2x upsample of an (H, W, C) tile; lane dim untouched.
    x = jnp.broadcast_to(x[:, :, None, :], (H, W, 2, C)).reshape(H, 2 * W, C)
    x = jnp.broadcast_to(x[:, None, :, :], (H, 2, 2 * W, C)).reshape(
        2 * H, 2 * W, C)
    return x


def _conv3x3_from_padded(xp_ref, w_ref, H, W, cin, cout):
    # 3x3 'same' conv as 9 shifted MXU matmuls over a zero-padded VMEM tile.
    # Slices are taken on a lane-dense (C=multiple of 128) layout.
    acc = jnp.zeros((H * W, cout), jnp.float32)
    for ky in range(3):
        for kx in range(3):
            patch = xp_ref[ky:ky + H, kx:kx + W, :].reshape(H * W, cin)
            t = ky * 3 + kx
            acc = acc + _mm(patch, w_ref[t * cin:(t + 1) * cin, :])
    return acc


# ----------------------------------------------------------------------------
# Kernels
# ----------------------------------------------------------------------------

def _initial_kernel(x_ref, wct_ref, bct_ref, wc3_ref, bc3_ref, o_ref, xp_ref,
                    *, n, cpad, inv_c):
    # WeightScaledConvTranspose2d(z, C, k=4, s=1, p=0) on a 1x1 input == matmul
    # (scale already folded into wct).
    y = _mm(x_ref[...], wct_ref[...])                 # (N, 16*cpad)
    y = y.reshape(n * 16, cpad) + bct_ref[...]        # rows ordered (n, i, j)
    y = _leaky_pixelnorm(y, inv_c)

    # Zero halo + interior write, then 3x3 conv over the padded VMEM scratch.
    xp_ref[...] = jnp.zeros_like(xp_ref)
    xp_ref[:, 1:5, 1:5, :] = y.reshape(n, 4, 4, cpad)

    acc = jnp.zeros((n * 16, cpad), jnp.float32)
    for ky in range(3):
        for kx in range(3):
            patch = xp_ref[:, ky:ky + 4, kx:kx + 4, :].reshape(n * 16, cpad)
            t = ky * 3 + kx
            acc = acc + _mm(patch, wc3_ref[t * cpad:(t + 1) * cpad, :])
    y = _leaky_pixelnorm(acc + bc3_ref[...], inv_c)
    o_ref[...] = y.reshape(n, 4, 4, cpad)


def _block_kernel(x_ref, w1_ref, b1_ref, w2_ref, b2_ref, o_ref,
                  xp1_ref, xp2_ref, *, H, W, cpin, cpout, inv_c):
    # Fused: nearest 2x upsample + halo pad + conv1(3x3)+LReLU+PixelNorm
    #        + halo pad + conv2(3x3)+LReLU+PixelNorm.  One image per grid step.
    H2, W2 = 2 * H, 2 * W

    xp1_ref[...] = jnp.zeros_like(xp1_ref)
    xp1_ref[1:H2 + 1, 1:W2 + 1, :] = _upsample2x(x_ref[0], H, W, cpin)

    h = _conv3x3_from_padded(xp1_ref, w1_ref, H2, W2, cpin, cpout) + b1_ref[...]
    h = _leaky_pixelnorm(h, inv_c)

    xp2_ref[...] = jnp.zeros_like(xp2_ref)
    xp2_ref[1:H2 + 1, 1:W2 + 1, :] = h.reshape(H2, W2, cpout)

    y = _conv3x3_from_padded(xp2_ref, w2_ref, H2, W2, cpout, cpout) + b2_ref[...]
    y = _leaky_pixelnorm(y, inv_c)
    o_ref[0] = y.reshape(H2, W2, cpout)


def _rgb_fade_kernel(alpha_ref, prev_ref, cur_ref, wp_ref, bp_ref,
                     wc_ref, bc_ref, o_ref, *, H, W, cp_prev, cp_cur, img_c):
    # Fused: to_rgb(prev) with nearest 2x upsample (1x1 conv commutes with
    # nearest upsample), to_rgb(cur), fade-in + tanh.  alpha is an SMEM scalar.
    H2, W2 = 2 * H, 2 * W
    a = alpha_ref[0]
    up = _upsample2x(prev_ref[0], H, W, cp_prev)              # (2H, 2W, Cp)
    rgb_up = _mm(up.reshape(H2 * W2, cp_prev), wp_ref[...]) + bp_ref[...]
    rgb_cur = _mm(cur_ref[0].reshape(H2 * W2, cp_cur), wc_ref[...]) + bc_ref[...]
    y = jnp.tanh(a * rgb_cur + (1.0 - a) * rgb_up)
    o_ref[0] = y.reshape(H2, W2, img_c)


def _rgb_only_kernel(x_ref, w_ref, b_ref, o_ref, *, n, H, W, cp, img_c):
    y = _mm(x_ref[...].reshape(n * H * W, cp), w_ref[...]) + b_ref[...]
    o_ref[...] = y.reshape(n, H, W, img_c)


# ----------------------------------------------------------------------------
# pallas_call wrappers
# ----------------------------------------------------------------------------

def initial_op(x, params):
    n, zd = x.shape
    cpad = params["cpad0"]
    kernel = functools.partial(_initial_kernel, n=n, cpad=cpad,
                               inv_c=1.0 / params["in_channels"])
    return pl.pallas_call(
        kernel,
        out_shape=jax.ShapeDtypeStruct((n, 4, 4, cpad), jnp.float32),
        grid=(1,),
        in_specs=[
            pl.BlockSpec((n, zd), lambda i: (0, 0)),
            pl.BlockSpec((zd, 16 * cpad), lambda i: (0, 0)),
            pl.BlockSpec((1, cpad), lambda i: (0, 0)),
            pl.BlockSpec((9 * cpad, cpad), lambda i: (0, 0)),
            pl.BlockSpec((1, cpad), lambda i: (0, 0)),
        ],
        out_specs=pl.BlockSpec((n, 4, 4, cpad), lambda i: (0, 0, 0, 0)),
        scratch_shapes=[pltpu.VMEM((n, 6, 6, cpad), jnp.float32)],
    )(x, params["init_ct_w"], params["init_ct_b"],
      params["init_c_w"], params["init_c_b"])


def fused_block_op(x, blk):
    N, H, W, cpin = x.shape
    cpout = blk["w1"].shape[1]
    H2, W2 = 2 * H, 2 * W
    kernel = functools.partial(_block_kernel, H=H, W=W, cpin=cpin, cpout=cpout,
                               inv_c=1.0 / blk["c_out"])
    # NOTE: for high resolutions add spatial (row) tiling with a halo so the
    # block fits v7x's 64 MiB VMEM and the row axis can feed both TensorCores.
    return pl.pallas_call(
        kernel,
        out_shape=jax.ShapeDtypeStruct((N, H2, W2, cpout), jnp.float32),
        grid=(N,),
        in_specs=[
            pl.BlockSpec((1, H, W, cpin), lambda n: (n, 0, 0, 0)),
            pl.BlockSpec((9 * cpin, cpout), lambda n: (0, 0)),
            pl.BlockSpec((1, cpout), lambda n: (0, 0)),
            pl.BlockSpec((9 * cpout, cpout), lambda n: (0, 0)),
            pl.BlockSpec((1, cpout), lambda n: (0, 0)),
        ],
        out_specs=pl.BlockSpec((1, H2, W2, cpout), lambda n: (n, 0, 0, 0)),
        scratch_shapes=[
            pltpu.VMEM((H2 + 2, W2 + 2, cpin), jnp.float32),
            pltpu.VMEM((H2 + 2, W2 + 2, cpout), jnp.float32),
        ],
        compiler_params=pltpu.CompilerParams(
            dimension_semantics=("parallel",)),
    )(x, blk["w1"], blk["b1"], blk["w2"], blk["b2"])


def rgb_fade_op(alpha, prev, cur, r_prev, r_cur, img_c):
    N, H, W, cp_prev = prev.shape
    _, H2, W2, cp_cur = cur.shape
    assert (H2, W2) == (2 * H, 2 * W)
    kernel = functools.partial(_rgb_fade_kernel, H=H, W=W,
                               cp_prev=cp_prev, cp_cur=cp_cur, img_c=img_c)
    alpha_arr = jnp.asarray(alpha, jnp.float32).reshape(1)
    return pl.pallas_call(
        kernel,
        out_shape=jax.ShapeDtypeStruct((N, H2, W2, img_c), jnp.float32),
        grid=(N,),
        in_specs=[
            pl.BlockSpec(memory_space=pltpu.MemorySpace.SMEM),   # alpha scalar
            pl.BlockSpec((1, H, W, cp_prev), lambda n: (n, 0, 0, 0)),
            pl.BlockSpec((1, H2, W2, cp_cur), lambda n: (n, 0, 0, 0)),
            pl.BlockSpec((cp_prev, img_c), lambda n: (0, 0)),
            pl.BlockSpec((1, img_c), lambda n: (0, 0)),
            pl.BlockSpec((cp_cur, img_c), lambda n: (0, 0)),
            pl.BlockSpec((1, img_c), lambda n: (0, 0)),
        ],
        out_specs=pl.BlockSpec((1, H2, W2, img_c), lambda n: (n, 0, 0, 0)),
        compiler_params=pltpu.CompilerParams(
            dimension_semantics=("parallel",)),
    )(alpha_arr, prev, cur, r_prev["w"], r_prev["b"], r_cur["w"], r_cur["b"])


def rgb_only_op(x, r, img_c):
    n, H, W, cp = x.shape
    kernel = functools.partial(_rgb_only_kernel, n=n, H=H, W=W, cp=cp,
                               img_c=img_c)
    return pl.pallas_call(
        kernel,
        out_shape=jax.ShapeDtypeStruct((n, H, W, img_c), jnp.float32),
    )(x, r["w"], r["b"])


# ----------------------------------------------------------------------------
# Parameter init (mirrors the torch module: normal_(std=1) weights, zero
# biases).  Equalized-LR scales are folded into the weights; channel dims are
# zero-padded to the lane width (padded channels stay exactly zero end-to-end).
# ----------------------------------------------------------------------------

def init_generator_params(key, z_dim, in_channels, img_channels, factors,
                          steps):
    keys = iter(jax.random.split(key, 64))
    cpad0 = _round_up(in_channels)
    params = {"in_channels": in_channels, "cpad0": cpad0,
              "img_channels": img_channels}

    # initial: WeightScaledConvTranspose2d(z_dim, C, k=4, s=1, p=0)
    s_ct = sqrt(2.0 / (z_dim * 16))
    wt = jax.random.normal(next(keys), (z_dim, in_channels, 4, 4), jnp.float32)
    wt = jnp.transpose(wt, (0, 2, 3, 1)) * s_ct                # (zd, 4, 4, C)
    wt = jnp.pad(wt, ((0, 0), (0, 0), (0, 0), (0, cpad0 - in_channels)))
    params["init_ct_w"] = wt.reshape(z_dim, 16 * cpad0)
    params["init_ct_b"] = jnp.zeros((1, cpad0), jnp.float32)

    # initial: WeightScaledConv2d(C, C, 3, 1, 1)
    s_c = sqrt(2.0 / (in_channels * 9))
    w = jax.random.normal(next(keys), (in_channels, in_channels, 3, 3),
                          jnp.float32)
    w = jnp.transpose(w, (2, 3, 1, 0)) * s_c                   # (3,3,Cin,Cout)
    w = jnp.pad(w, ((0, 0), (0, 0),
                    (0, cpad0 - in_channels), (0, cpad0 - in_channels)))
    params["init_c_w"] = w.reshape(9 * cpad0, cpad0)
    params["init_c_b"] = jnp.zeros((1, cpad0), jnp.float32)

    def make_rgb(k, cin, cpad):
        s = sqrt(2.0 / cin)
        wr = jax.random.normal(k, (img_channels, cin, 1, 1), jnp.float32)
        wr = jnp.transpose(wr, (2, 3, 1, 0)).reshape(cin, img_channels) * s
        wr = jnp.pad(wr, ((0, cpad - cin), (0, 0)))
        return dict(w=wr, b=jnp.zeros((1, img_channels), jnp.float32))

    rgb = [make_rgb(next(keys), in_channels, cpad0)]
    blocks = []
    for i in range(steps):
        cin = int(in_channels * factors[i])
        cout = int(in_channels * factors[i + 1])
        cpin, cpout = _round_up(cin), _round_up(cout)
        s1, s2 = sqrt(2.0 / (cin * 9)), sqrt(2.0 / (cout * 9))
        w1 = jax.random.normal(next(keys), (cout, cin, 3, 3), jnp.float32)
        w1 = jnp.pad(jnp.transpose(w1, (2, 3, 1, 0)) * s1,
                     ((0, 0), (0, 0), (0, cpin - cin), (0, cpout - cout)))
        w2 = jax.random.normal(next(keys), (cout, cout, 3, 3), jnp.float32)
        w2 = jnp.pad(jnp.transpose(w2, (2, 3, 1, 0)) * s2,
                     ((0, 0), (0, 0), (0, cpout - cout), (0, cpout - cout)))
        blocks.append(dict(w1=w1.reshape(9 * cpin, cpout),
                           b1=jnp.zeros((1, cpout), jnp.float32),
                           w2=w2.reshape(9 * cpout, cpout),
                           b2=jnp.zeros((1, cpout), jnp.float32),
                           c_out=cout))
        rgb.append(make_rgb(next(keys), cout, cpout))

    params["blocks"] = blocks
    params["rgb"] = rgb
    return params


# ----------------------------------------------------------------------------
# Generator forward (matches the torch module's control flow)
# ----------------------------------------------------------------------------

def generator_forward(params, x_nchw, alpha, steps):
    N = x_nchw.shape[0]
    x = x_nchw.reshape(N, -1)                 # (N, z_dim); latent spatial is 1x1

    out = initial_op(x, params)               # (N, 4, 4, Cpad)

    if steps == 0:
        y = rgb_only_op(out, params["rgb"][0], params["img_channels"])
        return jnp.transpose(y, (0, 3, 1, 2))  # back to NCHW

    prev = out
    for step in range(steps):
        blk = params["blocks"][step]
        prev = out                             # == input to this block (pre-upsample)
        out = fused_block_op(out, blk)         # upsample+ConvBlock fused

    y = rgb_fade_op(alpha, prev, out, params["rgb"][steps - 1],
                    params["rgb"][steps], params["img_channels"])
    return jnp.transpose(y, (0, 3, 1, 2))      # back to NCHW


# ----------------------------------------------------------------------------
# Demo
# ----------------------------------------------------------------------------

if __name__ == "__main__":
    z_dim = 16
    in_channels = 16
    img_channels = 3
    batch = 2
    steps = 2          # 4x4 -> 8x8 -> 16x16
    alpha = 0.7
    factors = [1, 1, 1, 1, 1 / 2, 1 / 4, 1 / 8, 1 / 16, 1 / 32]

    key = jax.random.PRNGKey(0)
    k_in, k_params = jax.random.split(key)

    x = jax.random.normal(k_in, (batch, z_dim, 1, 1), jnp.float32)  # NCHW latent
    params = init_generator_params(k_params, z_dim, in_channels,
                                   img_channels, factors, steps)

    out = generator_forward(params, x, alpha, steps)
    out = jax.block_until_ready(out)

    hw = 4 * (2 ** steps)
    assert out.shape == (batch, img_channels, hw, hw), out.shape
    assert bool(jnp.all(jnp.isfinite(out)))
    print("KERNEL_OK")
</pallas_src>

<mosaic_0001>
module attributes {stable_mosaic.version = 11 : i64} {
  func.func @_initial_kernel(%arg0: i32, %arg1: memref<2x16xf32, #tpu.memory_space<vmem>>, %arg2: memref<16x2048xf32, #tpu.memory_space<vmem>>, %arg3: memref<1x128xf32, #tpu.memory_space<vmem>>, %arg4: memref<1152x128xf32, #tpu.memory_space<vmem>>, %arg5: memref<1x128xf32, #tpu.memory_space<vmem>>, %arg6: memref<2x4x4x128xf32, #tpu.memory_space<vmem>>, %arg7: memref<2x6x6x128xf32, #tpu.memory_space<vmem>>) attributes {dimension_semantics = [#tpu.dimension_semantics<arbitrary>], iteration_bounds = array<i64: 1>, scalar_prefetch = 0 : i64, scratch_operands = 1 : i64, tpu.core_type = #tpu.core_type<tc>, window_params = [{pipeline_mode = #tpu.pipeline_mode<synchronous>, transform_indices = @transform_0, window_bounds = array<i64: 2, 16>}, {pipeline_mode = #tpu.pipeline_mode<synchronous>, transform_indices = @transform_1, window_bounds = array<i64: 16, 2048>}, {pipeline_mode = #tpu.pipeline_mode<synchronous>, transform_indices = @transform_2, window_bounds = array<i64: 1, 128>}, {pipeline_mode = #tpu.pipeline_mode<synchronous>, transform_indices = @transform_3, window_bounds = array<i64: 1152, 128>}, {pipeline_mode = #tpu.pipeline_mode<synchronous>, transform_indices = @transform_4, window_bounds = array<i64: 1, 128>}, {pipeline_mode = #tpu.pipeline_mode<synchronous>, transform_indices = @transform_5, window_bounds = array<i64: 2, 4, 4, 128>}]} {
    %c0 = arith.constant 0 : index
    %c0_0 = arith.constant 0 : index
    %0 = vector.load %arg1[%c0, %c0_0] : memref<2x16xf32, #tpu.memory_space<vmem>>, vector<2x16xf32>
    %c0_1 = arith.constant 0 : index
    %c0_2 = arith.constant 0 : index
    %1 = vector.load %arg2[%c0_1, %c0_2] : memref<16x2048xf32, #tpu.memory_space<vmem>>, vector<16x2048xf32>
    %cst = arith.constant dense<0.000000e+00> : vector<2x2048xf32>
    %2 = tpu.matmul %0, %1, %cst {dimension_numbers = #tpu.dot_dimension_numbers<[1], [0], [0], [1], [0, 0, 1, 1], [], []>} : vector<2x16xf32>, vector<16x2048xf32>, vector<2x2048xf32> -> vector<2x2048xf32>
    %3 = vector.shape_cast %2 : vector<2x2048xf32> to vector<32x128xf32>
    %c0_3 = arith.constant 0 : index
    %c0_4 = arith.constant 0 : index
    %4 = vector.load %arg3[%c0_3, %c0_4] : memref<1x128xf32, #tpu.memory_space<vmem>>, vector<1x128xf32>
    %5 = vector.broadcast %4 : vector<1x128xf32> to vector<32x128xf32>
    %6 = arith.addf %3, %5 : vector<32x128xf32>
    %cst_5 = arith.constant 2.000000e-01 : f32
    %7 = vector.broadcast %cst_5 : f32 to vector<32x128xf32>
    %8 = arith.mulf %7, %6 : vector<32x128xf32>
    %9 = arith.maximumf %6, %8 : vector<32x128xf32>
    %10 = arith.mulf %9, %9 : vector<32x128xf32>
    %cst_6 = arith.constant dense<0.000000e+00> : vector<32xf32>
    %11 = vector.multi_reduction <add>, %10, %cst_6 [1] : vector<32x128xf32> to vector<32xf32>
    %12 = vector.shape_cast %11 : vector<32xf32> to vector<32x1xf32>
    %cst_7 = arith.constant 6.250000e-02 : f32
    %13 = vector.broadcast %cst_7 : f32 to vector<32x1xf32>
    %14 = arith.mulf %12, %13 : vector<32x1xf32>
    %cst_8 = arith.constant 9.99999993E-9 : f32
    %15 = vector.broadcast %cst_8 : f32 to vector<32x1xf32>
    %16 = arith.addf %14, %15 : vector<32x1xf32>
    %17 = math.rsqrt %16 : vector<32x1xf32>
    %18 = vector.broadcast %17 : vector<32x1xf32> to vector<32x128xf32>
    %19 = arith.mulf %9, %18 : vector<32x128xf32>
    %cst_9 = arith.constant 0.000000e+00 : f32
    %20 = vector.broadcast %cst_9 : f32 to vector<2x6x6x128xf32>
    %c0_10 = arith.constant 0 : index
    %c0_11 = arith.constant 0 : index
    %c0_12 = arith.constant 0 : index
    %c0_13 = arith.constant 0 : index
    %21 = vector.load %arg7[%c0_10, %c0_11, %c0_12, %c0_13] : memref<2x6x6x128xf32, #tpu.memory_space<vmem>>, vector<2x6x6x128xf32>
    tpu.vector_store %arg7[%c0_10, %c0_11, %c0_12, %c0_13], %20 {strides = array<i32>} : memref<2x6x6x128xf32, #tpu.memory_space<vmem>>, vector<2x6x6x128xf32>,
    %22 = vector.shape_cast %19 : vector<32x128xf32> to vector<2x4x4x128xf32>
    %c0_14 = arith.constant 0 : index
    %c1 = arith.constant 1 : index
    %c1_15 = arith.constant 1 : index
    %c0_16 = arith.constant 0 : index
    %23 = vector.load %arg7[%c0_14, %c1, %c1_15, %c0_16] : memref<2x6x6x128xf32, #tpu.memory_space<vmem>>, vector<2x4x4x128xf32>
    tpu.vector_store %arg7[%c0_14, %c1, %c1_15, %c0_16], %22 {strides = array<i32>} : memref<2x6x6x128xf32, #tpu.memory_space<vmem>>, vector<2x4x4x128xf32>,
    %cst_17 = arith.constant 0.000000e+00 : f32
    %24 = vector.broadcast %cst_17 : f32 to vector<32x128xf32>
    %c0_18 = arith.constant 0 : index
    %c0_19 = arith.constant 0 : index
    %c0_20 = arith.constant 0 : index
    %c0_21 = arith.constant 0 : index
    %25 = vector.load %arg7[%c0_18, %c0_19, %c0_20, %c0_21] : memref<2x6x6x128xf32, #tpu.memory_space<vmem>>, vector<2x4x4x128xf32>
    %26 = vector.shape_cast %25 : vector<2x4x4x128xf32> to vector<32x128xf32>
    %c0_22 = arith.constant 0 : index
    %c0_23 = arith.constant 0 : index
    %27 = vector.load %arg4[%c0_22, %c0_23] : memref<1152x128xf32, #tpu.memory_space<vmem>>, vector<128x128xf32>
    %cst_24 = arith.constant dense<0.000000e+00> : vector<32x128xf32>
    %28 = tpu.matmul %26, %27, %cst_24 {dimension_numbers = #tpu.dot_dimension_numbers<[1], [0], [0], [1], [0, 0, 1, 1], [], []>} : vector<32x128xf32>, vector<128x128xf32>, vector<32x128xf32> -> vector<32x128xf32>
    %29 = arith.addf %24, %28 : vector<32x128xf32>
    %c0_25 = arith.constant 0 : index
    %c0_26 = arith.constant 0 : index
    %c1_27 = arith.constant 1 : index
    %c0_28 = arith.constant 0 : index
    %30 = vector.load %arg7[%c0_25, %c0_26, %c1_27, %c0_28] : memref<2x6x6x128xf32, #tpu.memory_space<vmem>>, vector<2x4x4x128xf32>
    %31 = vector.shape_cast %30 : vector<2x4x4x128xf32> to vector<32x128xf32>
    %c128 = arith.constant 128 : index
    %c0_29 = arith.constant 0 : index
    %32 = vector.load %arg4[%c128, %c0_29] : memref<1152x128xf32, #tpu.memory_space<vmem>>, vector<128x128xf32>
    %cst_30 = arith.constant dense<0.000000e+00> : vector<32x128xf32>
    %33 = tpu.matmul %31, %32, %cst_30 {dimension_numbers = #tpu.dot_dimension_numbers<[1], [0], [0], [1], [0, 0, 1, 1], [], []>} : vector<32x128xf32>, vector<128x128xf32>, vector<32x128xf32> -> vector<32x128xf32>
    %34 = arith.addf %29, %33 : vector<32x128xf32>
    %c0_31 = arith.constant 0 : index
    %c0_32 = arith.constant 0 : index
    %c2 = arith.constant 2 : index
    %c0_33 = arith.constant 0 : index
    %35 = vector.load %arg7[%c0_31, %c0_32, %c2, %c0_33] : memref<2x6x6x128xf32, #tpu.memory_space<vmem>>, vector<2x4x4x128xf32>
    %36 = vector.shape_cast %35 : vector<2x4x4x128xf32> to vector<32x128xf32>
    %c256 = arith.constant 256 : index
    %c0_34 = arith.constant 0 : index
    %37 = vector.load %arg4[%c256, %c0_34] : memref<1152x128xf32, #tpu.memory_space<vmem>>, vector<128x128xf32>
    %cst_35 = arith.constant dense<0.000000e+00> : vector<32x128xf32>
    %38 = tpu.matmul %36, %37, %cst_35 {dimension_numbers = #tpu.dot_dimension_numbers<[1], [0], [0], [1], [0, 0, 1, 1], [], []>} : vector<32x128xf32>, vector<128x128xf32>, vector<32x128xf32> -> vector<32x128xf32>
    %39 = arith.addf %34, %38 : vector<32x128xf32>
    %c0_36 = arith.constant 0 : index
    %c1_37 = arith.constant 1 : index
    %c0_38 = arith.constant 0 : index
    %c0_39 = arith.constant 0 : index
    %40 = vector.load %arg7[%c0_36, %c1_37, %c0_38, %c0_39] : memref<2x6x6x128xf32, #tpu.memory_space<vmem>>, vector<2x4x4x128xf32>
    %41 = vector.shape_cast %40 : vector<2x4x4x128xf32> to vector<32x128xf32>
    %c384 = arith.constant 384 : index
    %c0_40 = arith.constant 0 : index
    %42 = vector.load %arg4[%c384, %c0_40] : memref<1152x128xf32, #tpu.memory_space<vmem>>, vector<128x128xf32>
    %cst_41 = arith.constant dense<0.000000e+00> : vector<32x128xf32>
    %43 = tpu.matmul %41, %42, %cst_41 {dimension_numbers = #tpu.dot_dimension_numbers<[1], [0], [0], [1], [0, 0, 1, 1], [], []>} : vector<32x128xf32>, vector<128x128xf32>, vector<32x128xf32> -> vector<32x128xf32>
    %44 = arith.addf %39, %43 : vector<32x128xf32>
    %c0_42 = arith.constant 0 : index
    %c1_43 = arith.constant 1 : index
    %c1_44 = arith.constant 1 : index
    %c0_45 = arith.constant 0 : index
    %45 = vector.load %arg7[%c0_42, %c1_43, %c1_44, %c0_45] : memref<2x6x6x128xf32, #tpu.memory_space<vmem>>, vector<2x4x4x128xf32>
    %46 = vector.shape_cast %45 : vector<2x4x4x128xf32> to vector<32x128xf32>
    %c512 = arith.constant 512 : index
    %c0_46 = arith.constant 0 : index
    %47 = vector.load %arg4[%c512, %c0_46] : memref<1152x128xf32, #tpu.memory_space<vmem>>, vector<128x128xf32>
    %cst_47 = arith.constant dense<0.000000e+00> : vector<32x128xf32>
    %48 = tpu.matmul %46, %47, %cst_47 {dimension_numbers = #tpu.dot_dimension_numbers<[1], [0], [0], [1], [0, 0, 1, 1], [], []>} : vector<32x128xf32>, vector<128x128xf32>, vector<32x128xf32> -> vector<32x128xf32>
    %49 = arith.addf %44, %48 : vector<32x128xf32>
    %c0_48 = arith.constant 0 : index
    %c1_49 = arith.constant 1 : index
    %c2_50 = arith.constant 2 : index
    %c0_51 = arith.constant 0 : index
    %50 = vector.load %arg7[%c0_48, %c1_49, %c2_50, %c0_51] : memref<2x6x6x128xf32, #tpu.memory_space<vmem>>, vector<2x4x4x128xf32>
    %51 = vector.shape_cast %50 : vector<2x4x4x128xf32> to vector<32x128xf32>
    %c640 = arith.constant 640 : index
    %c0_52 = arith.constant 0 : index
    %52 = vector.load %arg4[%c640, %c0_52] : memref<1152x128xf32, #tpu.memory_space<vmem>>, vector<128x128xf32>
    %cst_53 = arith.constant dense<0.000000e+00> : vector<32x128xf32>
    %53 = tpu.matmul %51, %52, %cst_53 {dimension_numbers = #tpu.dot_dimension_numbers<[1], [0], [0], [1], [0, 0, 1, 1], [], []>} : vector<32x128xf32>, vector<128x128xf32>, vector<32x128xf32> -> vector<32x128xf32>
    %54 = arith.addf %49, %53 : vector<32x128xf32>
    %c0_54 = arith.constant 0 : index
    %c2_55 = arith.constant 2 : index
    %c0_56 = arith.constant 0 : index
    %c0_57 = arith.constant 0 : index
    %55 = vector.load %arg7[%c0_54, %c2_55, %c0_56, %c0_57] : memref<2x6x6x128xf32, #tpu.memory_space<vmem>>, vector<2x4x4x128xf32>
    %56 = vector.shape_cast %55 : vector<2x4x4x128xf32> to vector<32x128xf32>
    %c768 = arith.constant 768 : index
    %c0_58 = arith.constant 0 : index
    %57 = vector.load %arg4[%c768, %c0_58] : memref<1152x128xf32, #tpu.memory_space<vmem>>, vector<128x128xf32>
    %cst_59 = arith.constant dense<0.000000e+00> : vector<32x128xf32>
    %58 = tpu.matmul %56, %57, %cst_59 {dimension_numbers = #tpu.dot_dimension_numbers<[1], [0], [0], [1], [0, 0, 1, 1], [], []>} : vector<32x128xf32>, vector<128x128xf32>, vector<32x128xf32> -> vector<32x128xf32>
    %59 = arith.addf %54, %58 : vector<32x128xf32>
    %c0_60 = arith.constant 0 : index
    %c2_61 = arith.constant 2 : index
    %c1_62 = arith.constant 1 : index
    %c0_63 = arith.constant 0 : index
    %60 = vector.load %arg7[%c0_60, %c2_61, %c1_62, %c0_63] : memref<2x6x6x128xf32, #tpu.memory_space<vmem>>, vector<2x4x4x128xf32>
    %61 = vector.shape_cast %60 : vector<2x4x4x128xf32> to vector<32x128xf32>
    %c896 = arith.constant 896 : index
    %c0_64 = arith.constant 0 : index
    %62 = vector.load %arg4[%c896, %c0_64] : memref<1152x128xf32, #tpu.memory_space<vmem>>, vector<128x128xf32>
    %cst_65 = arith.constant dense<0.000000e+00> : vector<32x128xf32>
    %63 = tpu.matmul %61, %62, %cst_65 {dimension_numbers = #tpu.dot_dimension_numbers<[1], [0], [0], [1], [0, 0, 1, 1], [], []>} : vector<32x128xf32>, vector<128x128xf32>, vector<32x128xf32> -> vector<32x128xf32>
    %64 = arith.addf %59, %63 : vector<32x128xf32>
    %c0_66 = arith.constant 0 : index
    %c2_67 = arith.constant 2 : index
    %c2_68 = arith.constant 2 : index
    %c0_69 = arith.constant 0 : index
    %65 = vector.load %arg7[%c0_66, %c2_67, %c2_68, %c0_69] : memref<2x6x6x128xf32, #tpu.memory_space<vmem>>, vector<2x4x4x128xf32>
    %66 = vector.shape_cast %65 : vector<2x4x4x128xf32> to vector<32x128xf32>
    %c1024 = arith.constant 1024 : index
    %c0_70 = arith.constant 0 : index
    %67 = vector.load %arg4[%c1024, %c0_70] : memref<1152x128xf32, #tpu.memory_space<vmem>>, vector<128x128xf32>
    %cst_71 = arith.constant dense<0.000000e+00> : vector<32x128xf32>
    %68 = tpu.matmul %66, %67, %cst_71 {dimension_numbers = #tpu.dot_dimension_numbers<[1], [0], [0], [1], [0, 0, 1, 1], [], []>} : vector<32x128xf32>, vector<128x128xf32>, vector<32x128xf32> -> vector<32x128xf32>
    %69 = arith.addf %64, %68 : vector<32x128xf32>
    %c0_72 = arith.constant 0 : index
    %c0_73 = arith.constant 0 : index
    %70 = vector.load %arg5[%c0_72, %c0_73] : memref<1x128xf32, #tpu.memory_space<vmem>>, vector<1x128xf32>
    %71 = vector.broadcast %70 : vector<1x128xf32> to vector<32x128xf32>
    %72 = arith.addf %69, %71 : vector<32x128xf32>
    %cst_74 = arith.constant 2.000000e-01 : f32
    %73 = vector.broadcast %cst_74 : f32 to vector<32x128xf32>
    %74 = arith.mulf %73, %72 : vector<32x128xf32>
    %75 = arith.maximumf %72, %74 : vector<32x128xf32>
    %76 = arith.mulf %75, %75 : vector<32x128xf32>
    %cst_75 = arith.constant dense<0.000000e+00> : vector<32xf32>
    %77 = vector.multi_reduction <add>, %76, %cst_75 [1] : vector<32x128xf32> to vector<32xf32>
    %78 = vector.shape_cast %77 : vector<32xf32> to vector<32x1xf32>
    %cst_76 = arith.constant 6.250000e-02 : f32
    %79 = vector.broadcast %cst_76 : f32 to vector<32x1xf32>
    %80 = arith.mulf %78, %79 : vector<32x1xf32>
    %cst_77 = arith.constant 9.99999993E-9 : f32
    %81 = vector.broadcast %cst_77 : f32 to vector<32x1xf32>
    %82 = arith.addf %80, %81 : vector<32x1xf32>
    %83 = math.rsqrt %82 : vector<32x1xf32>
    %84 = vector.broadcast %83 : vector<32x1xf32> to vector<32x128xf32>
    %85 = arith.mulf %75, %84 : vector<32x128xf32>
    %86 = vector.shape_cast %85 : vector<32x128xf32> to vector<2x4x4x128xf32>
    %c0_78 = arith.constant 0 : index
    %c0_79 = arith.constant 0 : index
    %c0_80 = arith.constant 0 : index
    %c0_81 = arith.constant 0 : index
    %87 = vector.load %arg6[%c0_78, %c0_79, %c0_80, %c0_81] : memref<2x4x4x128xf32, #tpu.memory_space<vmem>>, vector<2x4x4x128xf32>
    tpu.vector_store %arg6[%c0_78, %c0_79, %c0_80, %c0_81], %86 {strides = array<i32>} : memref<2x4x4x128xf32, #tpu.memory_space<vmem>>, vector<2x4x4x128xf32>,
    return
  }
  func.func @transform_0(%arg0: i32) -> (i32, i32) {
    %c0_i32 = arith.constant 0 : i32
    %c0_i32_0 = arith.constant 0 : i32
    %c0_i32_1 = arith.constant 0 : i32
    return %c0_i32, %c0_i32_0 : i32, i32
  }
  func.func @transform_1(%arg0: i32) -> (i32, i32) {
    %c0_i32 = arith.constant 0 : i32
    %c0_i32_0 = arith.constant 0 : i32
    %c0_i32_1 = arith.constant 0 : i32
    return %c0_i32, %c0_i32_0 : i32, i32
  }
  func.func @transform_2(%arg0: i32) -> (i32, i32) {
    %c0_i32 = arith.constant 0 : i32
    %c0_i32_0 = arith.constant 0 : i32
    %c0_i32_1 = arith.constant 0 : i32
    return %c0_i32, %c0_i32_0 : i32, i32
  }
  func.func @transform_3(%arg0: i32) -> (i32, i32) {
    %c0_i32 = arith.constant 0 : i32
    %c0_i32_0 = arith.constant 0 : i32
    %c0_i32_1 = arith.constant 0 : i32
    return %c0_i32, %c0_i32_0 : i32, i32
  }
  func.func @transform_4(%arg0: i32) -> (i32, i32) {
    %c0_i32 = arith.constant 0 : i32
    %c0_i32_0 = arith.constant 0 : i32
    %c0_i32_1 = arith.constant 0 : i32
    return %c0_i32, %c0_i32_0 : i32, i32
  }
  func.func @transform_5(%arg0: i32) -> (i32, i32, i32, i32) {
    %c0_i32 = arith.constant 0 : i32
    %c0_i32_0 = arith.constant 0 : i32
    %c0_i32_1 = arith.constant 0 : i32
    %c0_i32_2 = arith.constant 0 : i32
    %c0_i32_3 = arith.constant 0 : i32
    return %c0_i32, %c0_i32_0, %c0_i32_1, %c0_i32_2 : i32, i32, i32, i32
  }
}

</mosaic_0001>

<llo_original>
// kernel: tpu_custom_call.1
$region0: #{tpu_custom_call.1}
  #allocation0 [shape = 'u32[]', space=smem, size = 0x4, offset = 0x4, fixed_abs, tag = 'smem constant byte address 0x4 - core index']
  #allocation1 [shape = 'u32[72,128]{1,0:T(1,128)}', space=vmem, size = 0x9000, scoped, tag = 'internal scratch']
  #allocation2 [shape = 'f32[2,6,6,128]{3,2,1,0:T(8,128)}', space=vmem, size = 0xc000, scoped, tag = 'scratch operand']
  %s0 = inlined_call_operand.hbm [shape: f32[2,16], index: 0, kind: input, shape index: {}]
  %s1 = inlined_call_operand.hbm [shape: f32[16,2048], index: 1, kind: input, shape index: {}]
  %s2 = inlined_call_operand.vmem [shape: f32[1,128], index: 2, kind: input, shape index: {}]
  %s3 = inlined_call_operand.hbm [shape: f32[1152,128], index: 3, kind: input, shape index: {}]
  %s4 = inlined_call_operand.vmem [shape: f32[1,128], index: 4, kind: input, shape index: {}]
  %s5 = inlined_call_operand.hbm [shape: f32[2,4,4,128], index: 5, kind: output, shape index: {}]
  %s6 = sld [smem:[#allocation0]]
  $region42: #{tpu_custom_call.1} parent=0
    _
  %s8 = ssub.s32 1, %s6
  %s9 = scalar_select 0, %s8, %s6
  $region1: #{tpu_custom_call.1} parent=0
    #allocation3 [shape = 'u8[1024]{0}', space=vmem, size = 0x400, scoped, tag = 'input window, operand 0, single buffered']
    #allocation4 [shape = 's32[1]{0}', space=sflag, size = 0x4, scoped, tag = 'scoped memory for tpu_custom_call.1']
    #allocation5 [shape = 's32[1]{0}', space=sflag, size = 0x4, scoped, tag = 'scoped memory for tpu_custom_call.1']
    #allocation6 [shape = 'u8[131072]{0}', space=vmem, size = 0x20000, scoped, tag = 'input window, operand 1, single buffered']
    #allocation7 [shape = 's32[1]{0}', space=sflag, size = 0x4, scoped, tag = 'scoped memory for tpu_custom_call.1']
    #allocation8 [shape = 'u8[589824]{0}', space=vmem, size = 0x90000, scoped, tag = 'input window, operand 3, single buffered']
    #allocation9 [shape = 'u8[16384]{0}', space=vmem, size = 0x4000, scoped, tag = 'output window, operand 0, single buffered']
    %10 = vsyncpa [#allocation4], 0
    %11 = vsyncpa [#allocation7], 0
    %12 = vsyncpa [#allocation5], 0
    // Predicated region
    $region2: #{tpu_custom_call.1} parent=1 // pred_check
      _
    $region3: #{tpu_custom_call.1} parent=1 // pred_check_branch
      %14 = sbr.rel (0) target = $region5
    $region4: #{tpu_custom_call.1} parent=1 // pred_region
      %16 = vsyncadd [#allocation4], 0
      %s18 = sshll.u32 %s0, 4
      %s19 = int_to_ptr.hbm [resolvable:$true] %s18
      %s20 = sshll.u32 [#allocation3], 4
      %s21 = int_to_ptr.vmem [resolvable:$true] %s20
      %23 = dma.hbm_to_vmem [thread:$0]  %s19, 32, %s21, [#allocation4]
    $region5: #{tpu_custom_call.1} parent=1 // pred_fallthru
      _
    // Predicated region
    $region6: #{tpu_custom_call.1} parent=1 // pred_check
      _
    $region7: #{tpu_custom_call.1} parent=1 // pred_check_branch
      %25 = sbr.rel (0) target = $region9
    $region8: #{tpu_custom_call.1} parent=1 // pred_region
      %27 = vsyncadd [#allocation7], 0
      %s28 = sshll.u32 %s1, 4
      %s29 = int_to_ptr.hbm [resolvable:$true] %s28
      %s30 = sshll.u32 [#allocation6], 4
      %s31 = int_to_ptr.vmem [resolvable:$true] %s30
      %36 = dma.hbm_to_vmem [thread:$0]  %s29, 4096, %s31, [#allocation7], 2048, 2048, 128
    $region9: #{tpu_custom_call.1} parent=1 // pred_fallthru
      _
    // Predicated region
    $region10: #{tpu_custom_call.1} parent=1 // pred_check
      _
    $region11: #{tpu_custom_call.1} parent=1 // pred_check_branch
      %38 = sbr.rel (0) target = $region13
    $region12: #{tpu_custom_call.1} parent=1 // pred_region
      _
    $region13: #{tpu_custom_call.1} parent=1 // pred_fallthru
      _
    // Predicated region
    $region14: #{tpu_custom_call.1} parent=1 // pred_check
      _
    $region15: #{tpu_custom_call.1} parent=1 // pred_check_branch
      %40 = sbr.rel (0) target = $region17
    $region16: #{tpu_custom_call.1} parent=1 // pred_region
      %42 = vsyncadd [#allocation7], 0
      %s43 = sshll.u32 %s3, 4
      %s44 = int_to_ptr.hbm [resolvable:$true] %s43
      %s45 = sshll.u32 [#allocation8], 4
      %s46 = int_to_ptr.vmem [resolvable:$true] %s45
      %51 = dma.hbm_to_vmem [thread:$0]  %s44, 18432, %s46, [#allocation7], 128, 128, 8
    $region17: #{tpu_custom_call.1} parent=1 // pred_fallthru
      _
    // Predicated region
    $region18: #{tpu_custom_call.1} parent=1 // pred_check
      _
    $region19: #{tpu_custom_call.1} parent=1 // pred_check_branch
      %53 = sbr.rel (0) target = $region21
    $region20: #{tpu_custom_call.1} parent=1 // pred_region
      _
    $region21: #{tpu_custom_call.1} parent=1 // pred_fallthru
      _
    // Predicated region
    $region22: #{tpu_custom_call.1} parent=1 // pred_check
      _
    $region23: #{tpu_custom_call.1} parent=1 // pred_check_branch
      %55 = sbr.rel (0) target = $region25
    $region24: #{tpu_custom_call.1} parent=1 // pred_region
      %57 = dma.done [#allocation4], 32
    $region25: #{tpu_custom_call.1} parent=1 // pred_fallthru
      _
    // Predicated region
    $region26: #{tpu_custom_call.1} parent=1 // pred_check
      _
    $region27: #{tpu_custom_call.1} parent=1 // pred_check_branch
      %59 = sbr.rel (0) target = $region29
    $region28: #{tpu_custom_call.1} parent=1 // pred_region
      %61 = dma.done [#allocation7], 4096
    $region29: #{tpu_custom_call.1} parent=1 // pred_fallthru
      _
    // Predicated region
    $region30: #{tpu_custom_call.1} parent=1 // pred_check
      _
    $region31: #{tpu_custom_call.1} parent=1 // pred_check_branch
      %63 = sbr.rel (0) target = $region33
    $region32: #{tpu_custom_call.1} parent=1 // pred_region
      %65 = dma.done [#allocation7], 18432
    $region33: #{tpu_custom_call.1} parent=1 // pred_fallthru
      _
    %v66 = vld [vmem:[#allocation3] sm:$0x3]
    %v67 = vld [vmem:[#allocation6] sm:$0xff]
    %v68 = vld [vmem:[#allocation6 + $0x8] sm:$0xff]
    %v69 = vld [vmem:[#allocation6 + $0x10] sm:$0xff]
    %v70 = vld [vmem:[#allocation6 + $0x18] sm:$0xff]
    %v71 = vld [vmem:[#allocation6 + $0x20] sm:$0xff]
    %v72 = vld [vmem:[#allocation6 + $0x28] sm:$0xff]
    %v73 = vld [vmem:[#allocation6 + $0x30] sm:$0xff]
    %v74 = vld [vmem:[#allocation6 + $0x38] sm:$0xff]
    %v75 = vld [vmem:[#allocation6 + $0x40] sm:$0xff]
    %v76 = vld [vmem:[#allocation6 + $0x48] sm:$0xff]
    %v77 = vld [vmem:[#allocation6 + $0x50] sm:$0xff]
    %v78 = vld [vmem:[#allocation6 + $0x58] sm:$0xff]
    %v79 = vld [vmem:[#allocation6 + $0x60] sm:$0xff]
    %v80 = vld [vmem:[#allocation6 + $0x68] sm:$0xff]
    %v81 = vld [vmem:[#allocation6 + $0x70] sm:$0xff]
    %v82 = vld [vmem:[#allocation6 + $0x78] sm:$0xff]
    %v83 = vld [vmem:[#allocation6 + $0x80] sm:$0xff]
    %v84 = vld [vmem:[#allocation6 + $0x88] sm:$0xff]
    %v85 = vld [vmem:[#allocation6 + $0x90] sm:$0xff]
    %v86 = vld [vmem:[#allocation6 + $0x98] sm:$0xff]
    %v87 = vld [vmem:[#allocation6 + $0xa0] sm:$0xff]
    %v88 = vld [vmem:[#allocation6 + $0xa8] sm:$0xff]
    %v89 = vld [vmem:[#allocation6 + $0xb0] sm:$0xff]
    %v90 = vld [vmem:[#allocation6 + $0xb8] sm:$0xff]
    %v91 = vld [vmem:[#allocation6 + $0xc0] sm:$0xff]
    %v92 = vld [vmem:[#allocation6 + $0xc8] sm:$0xff]
    %v93 = vld [vmem:[#allocation6 + $0xd0] sm:$0xff]
    %v94 = vld [vmem:[#allocation6 + $0xd8] sm:$0xff]
    %v95 = vld [vmem:[#allocation6 + $0xe0] sm:$0xff]
    %v96 = vld [vmem:[#allocation6 + $0xe8] sm:$0xff]
    %v97 = vld [vmem:[#allocation6 + $0xf0] sm:$0xff]
    %v98 = vld [vmem:[#allocation6 + $0xf8] sm:$0xff]
    %vm99 = vcmask 130048
    %v101 = vsel %vm99, %v66, 0
    %103 = vmatpush.msra.mxu0 0.0
    %104 = vmatpush.msra.mxu0 0.0
    %105 = vmatpush.msra.mxu0 0.0
    %106 = vmatpush.msra.mxu0 0.0
    %107 = vmatpush.msra.mxu0 0.0
    %108 = vmatpush.msra.mxu0 0.0
    %109 = vmatpush.msra.mxu0 0.0
    %110 = vmatpush.msra.mxu0 0.0
    %111 = vmatpush.msra.mxu0 0.0
    %112 = vmatpush.msra.mxu0 0.0
    %113 = vmatpush.msra.mxu0 0.0
    %114 = vmatpush.msra.mxu0 0.0
    %115 = vmatpush.msra.mxu0 0.0
    %116 = vmatpush.msra.mxu0 0.0
    %117 = vmatpush.msra.mxu0 %v83
    %118 = vmatpush.msra.mxu0 %v67
    %119 = vmatmul.f32.gmra.mxu0 %v101
    %v120 = vpop.f32.mrf.mxu0
    %v121 = vadd.f32 0.0, %v120
    %122 = vdwg.mxu0
    %123 = vmatpush.msra.mxu0 0.0
    %124 = vmatpush.msra.mxu0 0.0
    %125 = vmatpush.msra.mxu0 0.0
    %126 = vmatpush.msra.mxu0 0.0
    %127 = vmatpush.msra.mxu0 0.0
    %128 = vmatpush.msra.mxu0 0.0
    %129 = vmatpush.msra.mxu0 0.0
    %130 = vmatpush.msra.mxu0 0.0
    %131 = vmatpush.msra.mxu0 0.0
    %132 = vmatpush.msra.mxu0 0.0
    %133 = vmatpush.msra.mxu0 0.0
    %134 = vmatpush.msra.mxu0 0.0
    %135 = vmatpush.msra.mxu0 0.0
    %136 = vmatpush.msra.mxu0 0.0
    %137 = vmatpush.msra.mxu0 %v84
    %138 = vmatpush.msra.mxu0 %v68
    %139 = vmatmul.f32.gmra.mxu0 %v101
    %v140 = vpop.f32.mrf.mxu0
    %v141 = vadd.f32 0.0, %v140
    %142 = vdwg.mxu0
    %143 = vmatpush.msra.mxu0 0.0
    %144 = vmatpush.msra.mxu0 0.0
    %145 = vmatpush.msra.mxu0 0.0
    %146 = vmatpush.msra.mxu0 0.0
    %147 = vmatpush.msra.mxu0 0.0
    %148 = vmatpush.msra.mxu0 0.0
    %149 = vmatpush.msra.mxu0 0.0
    %150 = vmatpush.msra.mxu0 0.0
    %151 = vmatpush.msra.mxu0 0.0
    %152 = vmatpush.msra.mxu0 0.0
    %153 = vmatpush.msra.mxu0 0.0
    %154 = vmatpush.msra.mxu0 0.0
    %155 = vmatpush.msra.mxu0 0.0
    %156 = vmatpush.msra.mxu0 0.0
    %157 = vmatpush.msra.mxu0 %v85
    %158 = vmatpush.msra.mxu0 %v69
    %159 = vmatmul.f32.gmra.mxu0 %v101
    %v160 = vpop.f32.mrf.mxu0
    %v161 = vadd.f32 0.0, %v160
    %162 = vdwg.mxu0
    %163 = vmatpush.msra.mxu0 0.0
    %164 = vmatpush.msra.mxu0 0.0
    %165 = vmatpush.msra.mxu0 0.0
    %166 = vmatpush.msra.mxu0 0.0
    %167 = vmatpush.msra.mxu0 0.0
    %168 = vmatpush.msra.mxu0 0.0
    %169 = vmatpush.msra.mxu0 0.0
    %170 = vmatpush.msra.mxu0 0.0
    %171 = vmatpush.msra.mxu0 0.0
    %172 = vmatpush.msra.mxu0 0.0
    %173 = vmatpush.msra.mxu0 0.0
    %174 = vmatpush.msra.mxu0 0.0
    %175 = vmatpush.msra.mxu0 0.0
    %176 = vmatpush.msra.mxu0 0.0
    %177 = vmatpush.msra.mxu0 %v86
    %178 = vmatpush.msra.mxu0 %v70
    %179 = vmatmul.f32.gmra.mxu0 %v101
    %v180 = vpop.f32.mrf.mxu0
    %v181 = vadd.f32 0.0, %v180
    %182 = vdwg.mxu0
    %183 = vmatpush.msra.mxu0 0.0
    %184 = vmatpush.msra.mxu0 0.0
    %185 = vmatpush.msra.mxu0 0.0
    %186 = vmatpush.msra.mxu0 0.0
    %187 = vmatpush.msra.mxu0 0.0
    %188 = vmatpush.msra.mxu0 0.0
    %189 = vmatpush.msra.mxu0 0.0
    %190 = vmatpush.msra.mxu0 0.0
    %191 = vmatpush.msra.mxu0 0.0
    %192 = vmatpush.msra.mxu0 0.0
    %193 = vmatpush.msra.mxu0 0.0
    %194 = vmatpush.msra.mxu0 0.0
    %195 = vmatpush.msra.mxu0 0.0
    %196 = vmatpush.msra.mxu0 0.0
    %197 = vmatpush.msra.mxu0 %v87
    %198 = vmatpush.msra.mxu0 %v71
    %199 = vmatmul.f32.gmra.mxu0 %v101
    %v200 = vpop.f32.mrf.mxu0
    %v201 = vadd.f32 0.0, %v200
    %202 = vdwg.mxu0
    %203 = vmatpush.msra.mxu0 0.0
    %204 = vmatpush.msra.mxu0 0.0
    %205 = vmatpush.msra.mxu0 0.0
    %206 = vmatpush.msra.mxu0 0.0
    %207 = vmatpush.msra.mxu0 0.0
    %208 = vmatpush.msra.mxu0 0.0
    %209 = vmatpush.msra.mxu0 0.0
    %210 = vmatpush.msra.mxu0 0.0
    %211 = vmatpush.msra.mxu0 0.0
    %212 = vmatpush.msra.mxu0 0.0
    %213 = vmatpush.msra.mxu0 0.0
    %214 = vmatpush.msra.mxu0 0.0
    %215 = vmatpush.msra.mxu0 0.0
    %216 = vmatpush.msra.mxu0 0.0
    %217 = vmatpush.msra.mxu0 %v88
    %218 = vmatpush.msra.mxu0 %v72
    %219 = vmatmul.f32.gmra.mxu0 %v101
    %v220 = vpop.f32.mrf.mxu0
    %v221 = vadd.f32 0.0, %v220
    %222 = vdwg.mxu0
    %223 = vmatpush.msra.mxu0 0.0
    %224 = vmatpush.msra.mxu0 0.0
    %225 = vmatpush.msra.mxu0 0.0
    %226 = vmatpush.msra.mxu0 0.0
    %227 = vmatpush.msra.mxu0 0.0
    %228 = vmatpush.msra.mxu0 0.0
    %229 = vmatpush.msra.mxu0 0.0
    %230 = vmatpush.msra.mxu0 0.0
    %231 = vmatpush.msra.mxu0 0.0
    %232 = vmatpush.msra.mxu0 0.0
    %233 = vmatpush.msra.mxu0 0.0
    %234 = vmatpush.msra.mxu0 0.0
    %235 = vmatpush.msra.mxu0 0.0
    %236 = vmatpush.msra.mxu0 0.0
    %237 = vmatpush.msra.mxu0 %v89
    %238 = vmatpush.msra.mxu0 %v73
    %239 = vmatmul.f32.gmra.mxu0 %v101
    %v240 = vpop.f32.mrf.mxu0
    %v241 = vadd.f32 0.0, %v240
    %242 = vdwg.mxu0
    %243 = vmatpush.msra.mxu0 0.0
    %244 = vmatpush.msra.mxu0 0.0
    %245 = vmatpush.msra.mxu0 0.0
    %246 = vmatpush.msra.mxu0 0.0
    %247 = vmatpush.msra.mxu0 0.0
    %248 = vmatpush.msra.mxu0 0.0
    %249 = vmatpush.msra.mxu0 0.0
    %250 = vmatpush.msra.mxu0 0.0
    %251 = vmatpush.msra.mxu0 0.0
    %252 = vmatpush.msra.mxu0 0.0
    %253 = vmatpush.msra.mxu0 0.0
    %254 = vmatpush.msra.mxu0 0.0
    %255 = vmatpush.msra.mxu0 0.0
    %256 = vmatpush.msra.mxu0 0.0
    %257 = vmatpush.msra.mxu0 %v90
    %258 = vmatpush.msra.mxu0 %v74
    %259 = vmatmul.f32.gmra.mxu0 %v101
    %v260 = vpop.f32.mrf.mxu0
    %v261 = vadd.f32 0.0, %v260
    %262 = vdwg.mxu0
    %263 = vmatpush.msra.mxu0 0.0
    %264 = vmatpush.msra.mxu0 0.0
    %265 = vmatpush.msra.mxu0 0.0
    %266 = vmatpush.msra.mxu0 0.0
    %267 = vmatpush.msra.mxu0 0.0
    %268 = vmatpush.msra.mxu0 0.0
    %269 = vmatpush.msra.mxu0 0.0
    %270 = vmatpush.msra.mxu0 0.0
    %271 = vmatpush.msra.mxu0 0.0
    %272 = vmatpush.msra.mxu0 0.0
    %273 = vmatpush.msra.mxu0 0.0
    %274 = vmatpush.msra.mxu0 0.0
    %275 = vmatpush.msra.mxu0 0.0
    %276 = vmatpush.msra.mxu0 0.0
    %277 = vmatpush.msra.mxu0 %v91
    %278 = vmatpush.msra.mxu0 %v75
    %279 = vmatmul.f32.gmra.mxu0 %v101
    %v280 = vpop.f32.mrf.mxu0
    %v281 = vadd.f32 0.0, %v280
    %282 = vdwg.mxu0
    %283 = vmatpush.msra.mxu0 0.0
    %284 = vmatpush.msra.mxu0 0.0
    %285 = vmatpush.msra.mxu0 0.0
    %286 = vmatpush.msra.mxu0 0.0
    %287 = vmatpush.msra.mxu0 0.0
    %288 = vmatpush.msra.mxu0 0.0
    %289 = vmatpush.msra.mxu0 0.0
    %290 = vmatpush.msra.mxu0 0.0
    %291 = vmatpush.msra.mxu0 0.0
    %292 = vmatpush.msra.mxu0 0.0
    %293 = vmatpush.msra.mxu0 0.0
    %294 = vmatpush.msra.mxu0 0.0
    %295 = vmatpush.msra.mxu0 0.0
    %296 = vmatpush.msra.mxu0 0.0
    %297 = vmatpush.msra.mxu0 %v92
    %298 = vmatpush.msra.mxu0 %v76
    %299 = vmatmul.f32.gmra.mxu0 %v101
    %v300 = vpop.f32.mrf.mxu0
    %v301 = vadd.f32 0.0, %v300
    %302 = vdwg.mxu0
    %303 = vmatpush.msra.mxu0 0.0
    %304 = vmatpush.msra.mxu0 0.0
    %305 = vmatpush.msra.mxu0 0.0
    %306 = vmatpush.msra.mxu0 0.0
    %307 = vmatpush.msra.mxu0 0.0
    %308 = vmatpush.msra.mxu0 0.0
    %309 = vmatpush.msra.mxu0 0.0
    %310 = vmatpush.msra.mxu0 0.0
    %311 = vmatpush.msra.mxu0 0.0
    %312 = vmatpush.msra.mxu0 0.0
    %313 = vmatpush.msra.mxu0 0.0
    %314 = vmatpush.msra.mxu0 0.0
    %315 = vmatpush.msra.mxu0 0.0
    %316 = vmatpush.msra.mxu0 0.0
    %317 = vmatpush.msra.mxu0 %v93
    %318 = vmatpush.msra.mxu0 %v77
    %319 = vmatmul.f32.gmra.mxu0 %v101
    %v320 = vpop.f32.mrf.mxu0
    %v321 = vadd.f32 0.0, %v320
    %322 = vdwg.mxu0
    %323 = vmatpush.msra.mxu0 0.0
    %324 = vmatpush.msra.mxu0 0.0
    %325 = vmatpush.msra.mxu0 0.0
    %326 = vmatpush.msra.mxu0 0.0
    %327 = vmatpush.msra.mxu0 0.0
    %328 = vmatpush.msra.mxu0 0.0
    %329 = vmatpush.msra.mxu0 0.0
    %330 = vmatpush.msra.mxu0 0.0
    %331 = vmatpush.msra.mxu0 0.0
    %332 = vmatpush.msra.mxu0 0.0
    %333 = vmatpush.msra.mxu0 0.0
    %334 = vmatpush.msra.mxu0 0.0
    %335 = vmatpush.msra.mxu0 0.0
    %336 = vmatpush.msra.mxu0 0.0
    %337 = vmatpush.msra.mxu0 %v94
    %338 = vmatpush.msra.mxu0 %v78
    %339 = vmatmul.f32.gmra.mxu0 %v101
    %v340 = vpop.f32.mrf.mxu0
    %v341 = vadd.f32 0.0, %v340
    %342 = vdwg.mxu0
    %343 = vmatpush.msra.mxu0 0.0
    %344 = vmatpush.msra.mxu0 0.0
    %345 = vmatpush.msra.mxu0 0.0
    %346 = vmatpush.msra.mxu0 0.0
    %347 = vmatpush.msra.mxu0 0.0
    %348 = vmatpush.msra.mxu0 0.0
    %349 = vmatpush.msra.mxu0 0.0
    %350 = vmatpush.msra.mxu0 0.0
    %351 = vmatpush.msra.mxu0 0.0
    %352 = vmatpush.msra.mxu0 0.0
    %353 = vmatpush.msra.mxu0 0.0
    %354 = vmatpush.msra.mxu0 0.0
    %355 = vmatpush.msra.mxu0 0.0
    %356 = vmatpush.msra.mxu0 0.0
    %357 = vmatpush.msra.mxu0 %v95
    %358 = vmatpush.msra.mxu0 %v79
    %359 = vmatmul.f32.gmra.mxu0 %v101
    %v360 = vpop.f32.mrf.mxu0
    %v361 = vadd.f32 0.0, %v360
    %362 = vdwg.mxu0
    %363 = vmatpush.msra.mxu0 0.0
    %364 = vmatpush.msra.mxu0 0.0
    %365 = vmatpush.msra.mxu0 0.0
    %366 = vmatpush.msra.mxu0 0.0
    %367 = vmatpush.msra.mxu0 0.0
    %368 = vmatpush.msra.mxu0 0.0
    %369 = vmatpush.msra.mxu0 0.0
    %370 = vmatpush.msra.mxu0 0.0
    %371 = vmatpush.msra.mxu0 0.0
    %372 = vmatpush.msra.mxu0 0.0
    %373 = vmatpush.msra.mxu0 0.0
    %374 = vmatpush.msra.mxu0 0.0
    %375 = vmatpush.msra.mxu0 0.0
    %376 = vmatpush.msra.mxu0 0.0
    %377 = vmatpush.msra.mxu0 %v96
    %378 = vmatpush.msra.mxu0 %v80
    %379 = vmatmul.f32.gmra.mxu0 %v101
    %v380 = vpop.f32.mrf.mxu0
    %v381 = vadd.f32 0.0, %v380
    %382 = vdwg.mxu0
    %383 = vmatpush.msra.mxu0 0.0
    %384 = vmatpush.msra.mxu0 0.0
    %385 = vmatpush.msra.mxu0 0.0
    %386 = vmatpush.msra.mxu0 0.0
    %387 = vmatpush.msra.mxu0 0.0
    %388 = vmatpush.msra.mxu0 0.0
    %389 = vmatpush.msra.mxu0 0.0
    %390 = vmatpush.msra.mxu0 0.0
    %391 = vmatpush.msra.mxu0 0.0
    %392 = vmatpush.msra.mxu0 0.0
    %393 = vmatpush.msra.mxu0 0.0
    %394 = vmatpush.msra.mxu0 0.0
    %395 = vmatpush.msra.mxu0 0.0
    %396 = vmatpush.msra.mxu0 0.0
    %397 = vmatpush.msra.mxu0 %v97
    %398 = vmatpush.msra.mxu0 %v81
    %399 = vmatmul.f32.gmra.mxu0 %v101
    %v400 = vpop.f32.mrf.mxu0
    %v401 = vadd.f32 0.0, %v400
    %402 = vdwg.mxu0
    %403 = vmatpush.msra.mxu0 0.0
    %404 = vmatpush.msra.mxu0 0.0
    %405 = vmatpush.msra.mxu0 0.0
    %406 = vmatpush.msra.mxu0 0.0
    %407 = vmatpush.msra.mxu0 0.0
    %408 = vmatpush.msra.mxu0 0.0
    %409 = vmatpush.msra.mxu0 0.0
    %410 = vmatpush.msra.mxu0 0.0
    %411 = vmatpush.msra.mxu0 0.0
    %412 = vmatpush.msra.mxu0 0.0
    %413 = vmatpush.msra.mxu0 0.0
    %414 = vmatpush.msra.mxu0 0.0
    %415 = vmatpush.msra.mxu0 0.0
    %416 = vmatpush.msra.mxu0 0.0
    %417 = vmatpush.msra.mxu0 %v98
    %418 = vmatpush.msra.mxu0 %v82
    %419 = vmatmul.f32.gmra.mxu0 %v101
    %v420 = vpop.f32.mrf.mxu0
    %v421 = vadd.f32 0.0, %v420
    %422 = vdwg.mxu0
    %v439 = vrot.slane %v141, 7
    %v440 = vrot.slane %v161, 6
    %v441 = vrot.slane %v181, 5
    %v442 = vrot.slane %v201, 4
    %v443 = vrot.slane %v221, 3
    %v444 = vrot.slane %v241, 2
    %v445 = vrot.slane %v261, 1
    %v446 = vrot.slane %v301, 7
    %v447 = vrot.slane %v321, 6
    %v448 = vrot.slane %v341, 5
    %v449 = vrot.slane %v361, 4
    %v450 = vrot.slane %v381, 3
    %v451 = vrot.slane %v401, 2
    %v452 = vrot.slane %v421, 1
    %vm453 = vcmask 1040384
    %v454 = vsel %vm453, %v121, %v439
    %vm455 = vcmask 1042434
    %v456 = vsel %vm455, %v440, %v441
    %vm457 = vcmask 1041408
    %v458 = vsel %vm457, %v454, %v456
    %vm459 = vcmask 1044484
    %v460 = vsel %vm459, %v442, %v443
    %vm461 = vcmask 1046534
    %v462 = vsel %vm461, %v444, %v445
    %vm463 = vcmask 1045508
    %v464 = vsel %vm463, %v460, %v462
    %vm465 = vcmask 1043456
    %v466 = vsel %vm465, %v458, %v464
    %v467 = vsel %vm453, %v281, %v446
    %v468 = vsel %vm455, %v447, %v448
    %v469 = vsel %vm457, %v467, %v468
    %v470 = vsel %vm459, %v449, %v450
    %v471 = vsel %vm461, %v451, %v452
    %v472 = vsel %vm463, %v470, %v471
    %v473 = vsel %vm465, %v469, %v472
    %vm474 = vcmask 1041409
    %v475 = vsel %vm474, %v121, %v439
    %vm476 = vcmask 1043459
    %v477 = vsel %vm476, %v440, %v441
    %vm478 = vcmask 1042433
    %v479 = vsel %vm478, %v475, %v477
    %vm480 = vcmask 1045509
    %v481 = vsel %vm480, %v442, %v443
    %vm482 = vcmask 1046528
    %v483 = vsel %vm482, %v445, %v444
    %vm484 = vcmask 1046533
    %v485 = vsel %vm484, %v481, %v483
    %vm486 = vcmask 1044481
    %v487 = vsel %vm486, %v479, %v485
    %v488 = vrot.slane %v487, 1
    %v489 = vsel %vm474, %v281, %v446
    %v490 = vsel %vm476, %v447, %v448
    %v491 = vsel %vm478, %v489, %v490
    %v492 = vsel %vm480, %v449, %v450
    %v493 = vsel %vm482, %v452, %v451
    %v494 = vsel %vm484, %v492, %v493
    %v495 = vsel %vm486, %v491, %v494
    %v496 = vrot.slane %v495, 1
    %v501 = vld [vmem:[%s2] sm:$0x1]
    %v503 = vperm.slane %v501, 0
    %v505 = vadd.f32 %v466, %v503
    %v506 = vadd.f32 %v473, %v503
    %v507 = vadd.f32 %v488, %v503
    %v508 = vadd.f32 %v496, %v503
    %v509 = vmul.f32 %v505, 0.2
    %v510 = vmul.f32 %v506, 0.2
    %v511 = vmul.f32 %v507, 0.2
    %v512 = vmul.f32 %v508, 0.2
    %v513 = vmax.f32 %v505, %v509
    %v514 = vmax.f32 %v506, %v510
    %v515 = vmax.f32 %v507, %v511
    %v516 = vmax.f32 %v508, %v512
    %v517 = vmul.f32 %v513, %v513
    %v518 = vmul.f32 %v514, %v514
    %v519 = vmul.f32 %v515, %v515
    %v520 = vmul.f32 %v516, %v516
    %521 = vadd.xlane.f32.xlu0 %v517
    %v522 = vpop.xlane.xlu0 %521
    %523 = vadd.xlane.f32.xlu0 %v518
    %v524 = vpop.xlane.xlu0 %523
    %525 = vadd.xlane.f32.xlu0 %v519
    %v526 = vpop.xlane.xlu0 %525
    %527 = vadd.xlane.f32.xlu0 %v520
    %v528 = vpop.xlane.xlu0 %527
    %v529 = vmul.f32 %v522, 0.0625
    %v530 = vmul.f32 %v524, 0.0625
    %v531 = vmul.f32 %v526, 0.0625
    %v532 = vmul.f32 %v528, 0.0625
    %v533 = vadd.f32 %v529, 1e-08
    %v534 = vadd.f32 %v530, 1e-08
    %v535 = vadd.f32 %v531, 1e-08
    %v536 = vadd.f32 %v532, 1e-08
    %v537 = vrsqrt.pop %v533
    %v538 = vmul.f32 %v537, %v533
    %v539 = vmul.f32 %v538, %v537
    %v540 = vmul.f32 0.5, %v539
    %v541 = vsub.f32 1.5, %v540
    %v542 = vmul.f32 %v537, %v541
    %vm543 = vweird.f32 %v533
    %vm544 = vweird.f32 %v537
    %vm545 = vmor %vm543, %vm544
    %v546 = vsel %vm545, %v537, %v542
    %v547 = vrsqrt.pop %v534
    %v548 = vmul.f32 %v547, %v534
    %v549 = vmul.f32 %v548, %v547
    %v550 = vmul.f32 0.5, %v549
    %v551 = vsub.f32 1.5, %v550
    %v552 = vmul.f32 %v547, %v551
    %vm553 = vweird.f32 %v534
    %vm554 = vweird.f32 %v547
    %vm555 = vmor %vm553, %vm554
    %v556 = vsel %vm555, %v547, %v552
    %v557 = vrsqrt.pop %v535
    %v558 = vmul.f32 %v557, %v535
    %v559 = vmul.f32 %v558, %v557
    %v560 = vmul.f32 0.5, %v559
    %v561 = vsub.f32 1.5, %v560
    %v562 = vmul.f32 %v557, %v561
    %vm563 = vweird.f32 %v535
    %vm564 = vweird.f32 %v557
    %vm565 = vmor %vm563, %vm564
    %v566 = vsel %vm565, %v557, %v562
    %v567 = vrsqrt.pop %v536
    %v568 = vmul.f32 %v567, %v536
    %v569 = vmul.f32 %v568, %v567
    %v570 = vmul.f32 0.5, %v569
    %v571 = vsub.f32 1.5, %v570
    %v572 = vmul.f32 %v567, %v571
    %vm573 = vweird.f32 %v536
    %vm574 = vweird.f32 %v567
    %vm575 = vmor %vm573, %vm574
    %v576 = vsel %vm575, %v567, %v572
    %v577 = vmul.f32 %v513, %v546
    %v578 = vmul.f32 %v514, %v556
    %v579 = vmul.f32 %v515, %v566
    %v580 = vmul.f32 %v516, %v576
    %581 = vst [vmem:[#allocation2] sm:$0x3f] 0.0
    %582 = vst [vmem:[#allocation2 + $0x8] sm:$0x3f] 0.0
    %583 = vst [vmem:[#allocation2 + $0x10] sm:$0x3f] 0.0
    %584 = vst [vmem:[#allocation2 + $0x18] sm:$0x3f] 0.0
    %585 = vst [vmem:[#allocation2 + $0x20] sm:$0x3f] 0.0
    %586 = vst [vmem:[#allocation2 + $0x28] sm:$0x3f] 0.0
    %587 = vst [vmem:[#allocation2 + $0x30] sm:$0x3f] 0.0
    %588 = vst [vmem:[#allocation2 + $0x38] sm:$0x3f] 0.0
    %589 = vst [vmem:[#allocation2 + $0x40] sm:$0x3f] 0.0
    %590 = vst [vmem:[#allocation2 + $0x48] sm:$0x3f] 0.0
    %591 = vst [vmem:[#allocation2 + $0x50] sm:$0x3f] 0.0
    %592 = vst [vmem:[#allocation2 + $0x58] sm:$0x3f] 0.0
    %v597 = vrot.slane %v577, 4
    %v598 = vrot.slane %v578, 4
    %v599 = vrot.slane %v579, 4
    %v600 = vrot.slane %v580, 4
    %s605 = scalar_lea.vmem [#allocation2], 8
    %606 = vst [vmem:[%s605 + $0x1] sm:$0xf] %v577
    %607 = vst [vmem:[%s605 + $0x9] sm:$0xf] %v597
    %608 = vst [vmem:[%s605 + $0x11] sm:$0xf] %v578
    %609 = vst [vmem:[%s605 + $0x19] sm:$0xf] %v598
    %610 = vst [vmem:[%s605 + $0x31] sm:$0xf] %v579
    %611 = vst [vmem:[%s605 + $0x39] sm:$0xf] %v599
    %612 = vst [vmem:[%s605 + $0x41] sm:$0xf] %v580
    %613 = vst [vmem:[%s605 + $0x49] sm:$0xf] %v600
    %v614 = vld [vmem:[#allocation2] sm:$0xf]
    %v615 = vld [vmem:[#allocation2 + $0x8] sm:$0xf]
    %v616 = vld [vmem:[#allocation2 + $0x10] sm:$0xf]
    %v617 = vld [vmem:[#allocation2 + $0x18] sm:$0xf]
    %v618 = vld [vmem:[#allocation2 + $0x30] sm:$0xf]
    %v619 = vld [vmem:[#allocation2 + $0x38] sm:$0xf]
    %v620 = vld [vmem:[#allocation2 + $0x40] sm:$0xf]
    %v621 = vld [vmem:[#allocation2 + $0x48] sm:$0xf]
    %v622 = vld [vmem:[#allocation8] sm:$0xff]
    %v623 = vld [vmem:[#allocation8 + $0x8] sm:$0xff]
    %v624 = vld [vmem:[#allocation8 + $0x10] sm:$0xff]
    %v625 = vld [vmem:[#allocation8 + $0x18] sm:$0xff]
    %v626 = vld [vmem:[#allocation8 + $0x20] sm:$0xff]
    %v627 = vld [vmem:[#allocation8 + $0x28] sm:$0xff]
    %v628 = vld [vmem:[#allocation8 + $0x30] sm:$0xff]
    %v629 = vld [vmem:[#allocation8 + $0x38] sm:$0xff]
    %v630 = vld [vmem:[#allocation8 + $0x40] sm:$0xff]
    %v631 = vld [vmem:[#allocation8 + $0x48] sm:$0xff]
    %v632 = vld [vmem:[#allocation8 + $0x50] sm:$0xff]
    %v633 = vld [vmem:[#allocation8 + $0x58] sm:$0xff]
    %v634 = vld [vmem:[#allocation8 + $0x60] sm:$0xff]
    %v635 = vld [vmem:[#allocation8 + $0x68] sm:$0xff]
    %v636 = vld [vmem:[#allocation8 + $0x70] sm:$0xff]
    %v637 = vld [vmem:[#allocation8 + $0x78] sm:$0xff]
    %v638 = vld [vmem:[#allocation2 + $0x1] sm:$0xf]
    %v639 = vld [vmem:[#allocation2 + $0x9] sm:$0xf]
    %v640 = vld [vmem:[#allocation2 + $0x11] sm:$0xf]
    %v641 = vld [vmem:[#allocation2 + $0x19] sm:$0xf]
    %v642 = vld [vmem:[#allocation2 + $0x31] sm:$0xf]
    %v643 = vld [vmem:[#allocation2 + $0x39] sm:$0xf]
    %v644 = vld [vmem:[#allocation2 + $0x41] sm:$0xf]
    %v645 = vld [vmem:[#allocation2 + $0x49] sm:$0xf]
    %v646 = vld [vmem:[#allocation8 + $0x80] sm:$0xff]
    %v647 = vld [vmem:[#allocation8 + $0x88] sm:$0xff]
    %v648 = vld [vmem:[#allocation8 + $0x90] sm:$0xff]
    %v649 = vld [vmem:[#allocation8 + $0x98] sm:$0xff]
    %v650 = vld [vmem:[#allocation8 + $0xa0] sm:$0xff]
    %v651 = vld [vmem:[#allocation8 + $0xa8] sm:$0xff]
    %v652 = vld [vmem:[#allocation8 + $0xb0] sm:$0xff]
    %v653 = vld [vmem:[#allocation8 + $0xb8] sm:$0xff]
    %v654 = vld [vmem:[#allocation8 + $0xc0] sm:$0xff]
    %v655 = vld [vmem:[#allocation8 + $0xc8] sm:$0xff]
    %v656 = vld [vmem:[#allocation8 + $0xd0] sm:$0xff]
    %v657 = vld [vmem:[#allocation8 + $0xd8] sm:$0xff]
    %v658 = vld [vmem:[#allocation8 + $0xe0] sm:$0xff]
    %v659 = vld [vmem:[#allocation8 + $0xe8] sm:$0xff]
    %v660 = vld [vmem:[#allocation8 + $0xf0] sm:$0xff]
    %v661 = vld [vmem:[#allocation8 + $0xf8] sm:$0xff]
    %670 = vst [vmem:[#allocation1] ss:$2 sm:$0xff] %v638
    %s671 = scalar_lea.vmem [#allocation1], 1
    %672 = vst [vmem:[%s671] ss:$2 sm:$0xff] %v639
    %s673 = scalar_lea.vmem [#allocation1], 16
    %674 = vst [vmem:[%s673] ss:$2 sm:$0xff] %v640
    %s675 = scalar_lea.vmem [#allocation1], 17
    %676 = vst [vmem:[%s675] ss:$2 sm:$0xff] %v641
    %s677 = scalar_lea.vmem [#allocation1], 32
    %678 = vst [vmem:[%s677] ss:$2 sm:$0xff] %v642
    %s679 = scalar_lea.vmem [#allocation1], 33
    %680 = vst [vmem:[%s679] ss:$2 sm:$0xff] %v643
    %s681 = scalar_lea.vmem [#allocation1], 48
    %682 = vst [vmem:[%s681] ss:$2 sm:$0xff] %v644
    %s683 = scalar_lea.vmem [#allocation1], 49
    %684 = vst [vmem:[%s683] ss:$2 sm:$0xff] %v645
    %v685 = vld.sshfl [vmem:[#allocation1] sm:$0xff pattern:$0x75316420]
    %v686 = vld.sshfl [vmem:[#allocation1 + $0x10] sm:$0xff pattern:$0x75316420]
    %v687 = vld.sshfl [vmem:[#allocation1 + $0x20] sm:$0xff pattern:$0x75316420]
    %v688 = vld.sshfl [vmem:[#allocation1 + $0x30] sm:$0xff pattern:$0x75316420]
    %693 = vmatpush.msra.mxu0 %v661
    %694 = vmatpush.msra.mxu0 %v660
    %695 = vmatpush.msra.mxu0 %v659
    %696 = vmatpush.msra.mxu0 %v658
    %697 = vmatpush.msra.mxu0 %v657
    %698 = vmatpush.msra.mxu0 %v656
    %699 = vmatpush.msra.mxu0 %v655
    %700 = vmatpush.msra.mxu0 %v654
    %701 = vmatpush.msra.mxu0 %v653
    %702 = vmatpush.msra.mxu0 %v652
    %703 = vmatpush.msra.mxu0 %v651
    %704 = vmatpush.msra.mxu0 %v650
    %705 = vmatpush.msra.mxu0 %v649
    %706 = vmatpush.msra.mxu0 %v648
    %707 = vmatpush.msra.mxu0 %v647
    %708 = vmatpush.msra.mxu0 %v646
    %709 = vmatmul.f32.gmra.mxu0 %v685
    %v710 = vpop.f32.mrf.mxu0
    %v711 = vadd.f32 0.0, %v710
    %712 = vmatmul.f32.gmra.mxu0 %v686
    %v713 = vpop.f32.mrf.mxu0
    %v714 = vadd.f32 0.0, %v713
    %715 = vmatmul.f32.gmra.mxu0 %v687
    %v716 = vpop.f32.mrf.mxu0
    %v717 = vadd.f32 0.0, %v716
    %718 = vmatmul.f32.gmra.mxu0 %v688
    %v719 = vpop.f32.mrf.mxu0
    %v720 = vadd.f32 0.0, %v719
    %721 = vdwg.mxu0
    %730 = vst [vmem:[#allocation1] ss:$2 sm:$0xff] %v614
    %s731 = scalar_lea.vmem [#allocation1], 1
    %732 = vst [vmem:[%s731] ss:$2 sm:$0xff] %v615
    %s733 = scalar_lea.vmem [#allocation1], 16
    %734 = vst [vmem:[%s733] ss:$2 sm:$0xff] %v616
    %s735 = scalar_lea.vmem [#allocation1], 17
    %736 = vst [vmem:[%s735] ss:$2 sm:$0xff] %v617
    %s737 = scalar_lea.vmem [#allocation1], 32
    %738 = vst [vmem:[%s737] ss:$2 sm:$0xff] %v618
    %s739 = scalar_lea.vmem [#allocation1], 33
    %740 = vst [vmem:[%s739] ss:$2 sm:$0xff] %v619
    %s741 = scalar_lea.vmem [#allocation1], 48
    %742 = vst [vmem:[%s741] ss:$2 sm:$0xff] %v620
    %s743 = scalar_lea.vmem [#allocation1], 49
    %744 = vst [vmem:[%s743] ss:$2 sm:$0xff] %v621
    %v745 = vld.sshfl [vmem:[#allocation1] sm:$0xff pattern:$0x75316420]
    %v746 = vld.sshfl [vmem:[#allocation1 + $0x10] sm:$0xff pattern:$0x75316420]
    %v747 = vld.sshfl [vmem:[#allocation1 + $0x20] sm:$0xff pattern:$0x75316420]
    %v748 = vld.sshfl [vmem:[#allocation1 + $0x30] sm:$0xff pattern:$0x75316420]
    %753 = vmatpush.msra.mxu0 %v637
    %754 = vmatpush.msra.mxu0 %v636
    %755 = vmatpush.msra.mxu0 %v635
    %756 = vmatpush.msra.mxu0 %v634
    %757 = vmatpush.msra.mxu0 %v633
    %758 = vmatpush.msra.mxu0 %v632
    %759 = vmatpush.msra.mxu0 %v631
    %760 = vmatpush.msra.mxu0 %v630
    %761 = vmatpush.msra.mxu0 %v629
    %762 = vmatpush.msra.mxu0 %v628
    %763 = vmatpush.msra.mxu0 %v627
    %764 = vmatpush.msra.mxu0 %v626
    %765 = vmatpush.msra.mxu0 %v625
    %766 = vmatpush.msra.mxu0 %v624
    %767 = vmatpush.msra.mxu0 %v623
    %768 = vmatpush.msra.mxu0 %v622
    %769 = vmatmul.f32.gmra.mxu0 %v745
    %v770 = vpop.f32.mrf.mxu0
    %v771 = vadd.f32 %v711, %v770
    %772 = vmatmul.f32.gmra.mxu0 %v746
    %v773 = vpop.f32.mrf.mxu0
    %v774 = vadd.f32 %v714, %v773
    %775 = vmatmul.f32.gmra.mxu0 %v747
    %v776 = vpop.f32.mrf.mxu0
    %v777 = vadd.f32 %v717, %v776
    %778 = vmatmul.f32.gmra.mxu0 %v748
    %v779 = vpop.f32.mrf.mxu0
    %v780 = vadd.f32 %v720, %v779
    %781 = vdwg.mxu0
    %v782 = vld [vmem:[#allocation2 + $0x2] sm:$0xf]
    %v783 = vld [vmem:[#allocation2 + $0xa] sm:$0xf]
    %v784 = vld [vmem:[#allocation2 + $0x12] sm:$0xf]
    %v785 = vld [vmem:[#allocation2 + $0x1a] sm:$0xf]
    %v786 = vld [vmem:[#allocation2 + $0x32] sm:$0xf]
    %v787 = vld [vmem:[#allocation2 + $0x3a] sm:$0xf]
    %v788 = vld [vmem:[#allocation2 + $0x42] sm:$0xf]
    %v789 = vld [vmem:[#allocation2 + $0x4a] sm:$0xf]
    %v790 = vld [vmem:[#allocation8 + $0x100] sm:$0xff]
    %v791 = vld [vmem:[#allocation8 + $0x108] sm:$0xff]
    %v792 = vld [vmem:[#allocation8 + $0x110] sm:$0xff]
    %v793 = vld [vmem:[#allocation8 + $0x118] sm:$0xff]
    %v794 = vld [vmem:[#allocation8 + $0x120] sm:$0xff]
    %v795 = vld [vmem:[#allocation8 + $0x128] sm:$0xff]
    %v796 = vld [vmem:[#allocation8 + $0x130] sm:$0xff]
    %v797 = vld [vmem:[#allocation8 + $0x138] sm:$0xff]
    %v798 = vld [vmem:[#allocation8 + $0x140] sm:$0xff]
    %v799 = vld [vmem:[#allocation8 + $0x148] sm:$0xff]
    %v800 = vld [vmem:[#allocation8 + $0x150] sm:$0xff]
    %v801 = vld [vmem:[#allocation8 + $0x158] sm:$0xff]
    %v802 = vld [vmem:[#allocation8 + $0x160] sm:$0xff]
    %v803 = vld [vmem:[#allocation8 + $0x168] sm:$0xff]
    %v804 = vld [vmem:[#allocation8 + $0x170] sm:$0xff]
    %v805 = vld [vmem:[#allocation8 + $0x178] sm:$0xff]
    %814 = vst [vmem:[#allocation1] ss:$2 sm:$0xff] %v782
    %s815 = scalar_lea.vmem [#allocation1], 1
    %816 = vst [vmem:[%s815] ss:$2 sm:$0xff] %v783
    %s817 = scalar_lea.vmem [#allocation1], 16
    %818 = vst [vmem:[%s817] ss:$2 sm:$0xff] %v784
    %s819 = scalar_lea.vmem [#allocation1], 17
    %820 = vst [vmem:[%s819] ss:$2 sm:$0xff] %v785
    %s821 = scalar_lea.vmem [#allocation1], 32
    %822 = vst [vmem:[%s821] ss:$2 sm:$0xff] %v786
    %s823 = scalar_lea.vmem [#allocation1], 33
    %824 = vst [vmem:[%s823] ss:$2 sm:$0xff] %v787
    %s825 = scalar_lea.vmem [#allocation1], 48
    %826 = vst [vmem:[%s825] ss:$2 sm:$0xff] %v788
    %s827 = scalar_lea.vmem [#allocation1], 49
    %828 = vst [vmem:[%s827] ss:$2 sm:$0xff] %v789
    %v829 = vld.sshfl [vmem:[#allocation1] sm:$0xff pattern:$0x75316420]
    %v830 = vld.sshfl [vmem:[#allocation1 + $0x10] sm:$0xff pattern:$0x75316420]
    %v831 = vld.sshfl [vmem:[#allocation1 + $0x20] sm:$0xff pattern:$0x75316420]
    %v832 = vld.sshfl [vmem:[#allocation1 + $0x30] sm:$0xff pattern:$0x75316420]
    %837 = vmatpush.msra.mxu0 %v805
    %838 = vmatpush.msra.mxu0 %v804
    %839 = vmatpush.msra.mxu0 %v803
    %840 = vmatpush.msra.mxu0 %v802
    %841 = vmatpush.msra.mxu0 %v801
    %842 = vmatpush.msra.mxu0 %v800
    %843 = vmatpush.msra.mxu0 %v799
    %844 = vmatpush.msra.mxu0 %v798
    %845 = vmatpush.msra.mxu0 %v797
    %846 = vmatpush.msra.mxu0 %v796
    %847 = vmatpush.msra.mxu0 %v795
    %848 = vmatpush.msra.mxu0 %v794
    %849 = vmatpush.msra.mxu0 %v793
    %850 = vmatpush.msra.mxu0 %v792
    %851 = vmatpush.msra.mxu0 %v791
    %852 = vmatpush.msra.mxu0 %v790
    %853 = vmatmul.f32.gmra.mxu0 %v829
    %v854 = vpop.f32.mrf.mxu0
    %v855 = vadd.f32 0.0, %v854
    %856 = vmatmul.f32.gmra.mxu0 %v830
    %v857 = vpop.f32.mrf.mxu0
    %v858 = vadd.f32 0.0, %v857
    %859 = vmatmul.f32.gmra.mxu0 %v831
    %v860 = vpop.f32.mrf.mxu0
    %v861 = vadd.f32 0.0, %v860
    %862 = vmatmul.f32.gmra.mxu0 %v832
    %v863 = vpop.f32.mrf.mxu0
    %v864 = vadd.f32 0.0, %v863
    %865 = vdwg.mxu0
    %v866 = vadd.f32 %v771, %v855
    %v867 = vadd.f32 %v774, %v858
    %v868 = vadd.f32 %v777, %v861
    %v869 = vadd.f32 %v780, %v864
    %v870 = vld [vmem:[%s605] sm:$0xf]
    %v871 = vld [vmem:[%s605 + $0x8] sm:$0xf]
    %v872 = vld [vmem:[%s605 + $0x10] sm:$0xf]
    %v873 = vld [vmem:[%s605 + $0x18] sm:$0xf]
    %v874 = vld [vmem:[%s605 + $0x30] sm:$0xf]
    %v875 = vld [vmem:[%s605 + $0x38] sm:$0xf]
    %v876 = vld [vmem:[%s605 + $0x40] sm:$0xf]
    %v877 = vld [vmem:[%s605 + $0x48] sm:$0xf]
    %v878 = vld [vmem:[#allocation8 + $0x180] sm:$0xff]
    %v879 = vld [vmem:[#allocation8 + $0x188] sm:$0xff]
    %v880 = vld [vmem:[#allocation8 + $0x190] sm:$0xff]
    %v881 = vld [vmem:[#allocation8 + $0x198] sm:$0xff]
    %v882 = vld [vmem:[#allocation8 + $0x1a0] sm:$0xff]
    %v883 = vld [vmem:[#allocation8 + $0x1a8] sm:$0xff]
    %v884 = vld [vmem:[#allocation8 + $0x1b0] sm:$0xff]
    %v885 = vld [vmem:[#allocation8 + $0x1b8] sm:$0xff]
    %v886 = vld [vmem:[#allocation8 + $0x1c0] sm:$0xff]
    %v887 = vld [vmem:[#allocation8 + $0x1c8] sm:$0xff]
    %v888 = vld [vmem:[#allocation8 + $0x1d0] sm:$0xff]
    %v889 = vld [vmem:[#allocation8 + $0x1d8] sm:$0xff]
    %v890 = vld [vmem:[#allocation8 + $0x1e0] sm:$0xff]
    %v891 = vld [vmem:[#allocation8 + $0x1e8] sm:$0xff]
    %v892 = vld [vmem:[#allocation8 + $0x1f0] sm:$0xff]
    %v893 = vld [vmem:[#allocation8 + $0x1f8] sm:$0xff]
    %902 = vst [vmem:[#allocation1] ss:$2 sm:$0xff] %v870
    %s903 = scalar_lea.vmem [#allocation1], 1
    %904 = vst [vmem:[%s903] ss:$2 sm:$0xff] %v871
    %s905 = scalar_lea.vmem [#allocation1], 16
    %906 = vst [vmem:[%s905] ss:$2 sm:$0xff] %v872
    %s907 = scalar_lea.vmem [#allocation1], 17
    %908 = vst [vmem:[%s907] ss:$2 sm:$0xff] %v873
    %s909 = scalar_lea.vmem [#allocation1], 32
    %910 = vst [vmem:[%s909] ss:$2 sm:$0xff] %v874
    %s911 = scalar_lea.vmem [#allocation1], 33
    %912 = vst [vmem:[%s911] ss:$2 sm:$0xff] %v875
    %s913 = scalar_lea.vmem [#allocation1], 48
    %914 = vst [vmem:[%s913] ss:$2 sm:$0xff] %v876
    %s915 = scalar_lea.vmem [#allocation1], 49
    %916 = vst [vmem:[%s915] ss:$2 sm:$0xff] %v877
    %v917 = vld.sshfl [vmem:[#allocation1] sm:$0xff pattern:$0x75316420]
    %v918 = vld.sshfl [vmem:[#allocation1 + $0x10] sm:$0xff pattern:$0x75316420]
    %v919 = vld.sshfl [vmem:[#allocation1 + $0x20] sm:$0xff pattern:$0x75316420]
    %v920 = vld.sshfl [vmem:[#allocation1 + $0x30] sm:$0xff pattern:$0x75316420]
    %925 = vmatpush.msra.mxu0 %v893
    %926 = vmatpush.msra.mxu0 %v892
    %927 = vmatpush.msra.mxu0 %v891
    %928 = vmatpush.msra.mxu0 %v890
    %929 = vmatpush.msra.mxu0 %v889
    %930 = vmatpush.msra.mxu0 %v888
    %931 = vmatpush.msra.mxu0 %v887
    %932 = vmatpush.msra.mxu0 %v886
    %933 = vmatpush.msra.mxu0 %v885
    %934 = vmatpush.msra.mxu0 %v884
    %935 = vmatpush.msra.mxu0 %v883
    %936 = vmatpush.msra.mxu0 %v882
    %937 = vmatpush.msra.mxu0 %v881
    %938 = vmatpush.msra.mxu0 %v880
    %939 = vmatpush.msra.mxu0 %v879
    %940 = vmatpush.msra.mxu0 %v878
    %941 = vmatmul.f32.gmra.mxu0 %v917
    %v942 = vpop.f32.mrf.mxu0
    %v943 = vadd.f32 0.0, %v942
    %944 = vmatmul.f32.gmra.mxu0 %v918
    %v945 = vpop.f32.mrf.mxu0
    %v946 = vadd.f32 0.0, %v945
    %947 = vmatmul.f32.gmra.mxu0 %v919
    %v948 = vpop.f32.mrf.mxu0
    %v949 = vadd.f32 0.0, %v948
    %950 = vmatmul.f32.gmra.mxu0 %v920
    %v951 = vpop.f32.mrf.mxu0
    %v952 = vadd.f32 0.0, %v951
    %953 = vdwg.mxu0
    %v954 = vadd.f32 %v866, %v943
    %v955 = vadd.f32 %v867, %v946
    %v956 = vadd.f32 %v868, %v949
    %v957 = vadd.f32 %v869, %v952
    %v958 = vld [vmem:[%s605 + $0x1] sm:$0xf]
    %v959 = vld [vmem:[%s605 + $0x9] sm:$0xf]
    %v960 = vld [vmem:[%s605 + $0x11] sm:$0xf]
    %v961 = vld [vmem:[%s605 + $0x19] sm:$0xf]
    %v962 = vld [vmem:[%s605 + $0x31] sm:$0xf]
    %v963 = vld [vmem:[%s605 + $0x39] sm:$0xf]
    %v964 = vld [vmem:[%s605 + $0x41] sm:$0xf]
    %v965 = vld [vmem:[%s605 + $0x49] sm:$0xf]
    %v966 = vld [vmem:[#allocation8 + $0x200] sm:$0xff]
    %v967 = vld [vmem:[#allocation8 + $0x208] sm:$0xff]
    %v968 = vld [vmem:[#allocation8 + $0x210] sm:$0xff]
    %v969 = vld [vmem:[#allocation8 + $0x218] sm:$0xff]
    %v970 = vld [vmem:[#allocation8 + $0x220] sm:$0xff]
    %v971 = vld [vmem:[#allocation8 + $0x228] sm:$0xff]
    %v972 = vld [vmem:[#allocation8 + $0x230] sm:$0xff]
    %v973 = vld [vmem:[#allocation8 + $0x238] sm:$0xff]
    %v974 = vld [vmem:[#allocation8 + $0x240] sm:$0xff]
    %v975 = vld [vmem:[#allocation8 + $0x248] sm:$0xff]
    %v976 = vld [vmem:[#allocation8 + $0x250] sm:$0xff]
    %v977 = vld [vmem:[#allocation8 + $0x258] sm:$0xff]
    %v978 = vld [vmem:[#allocation8 + $0x260] sm:$0xff]
    %v979 = vld [vmem:[#allocation8 + $0x268] sm:$0xff]
    %v980 = vld [vmem:[#allocation8 + $0x270] sm:$0xff]
    %v981 = vld [vmem:[#allocation8 + $0x278] sm:$0xff]
    %990 = vst [vmem:[#allocation1] ss:$2 sm:$0xff] %v958
    %s991 = scalar_lea.vmem [#allocation1], 1
    %992 = vst [vmem:[%s991] ss:$2 sm:$0xff] %v959
    %s993 = scalar_lea.vmem [#allocation1], 16
    %994 = vst [vmem:[%s993] ss:$2 sm:$0xff] %v960
    %s995 = scalar_lea.vmem [#allocation1], 17
    %996 = vst [vmem:[%s995] ss:$2 sm:$0xff] %v961
    %s997 = scalar_lea.vmem [#allocation1], 32
    %998 = vst [vmem:[%s997] ss:$2 sm:$0xff] %v962
    %s999 = scalar_lea.vmem [#allocation1], 33
    %1000 = vst [vmem:[%s999] ss:$2 sm:$0xff] %v963
    %s1001 = scalar_lea.vmem [#allocation1], 48
    %1002 = vst [vmem:[%s1001] ss:$2 sm:$0xff] %v964
    %s1003 = scalar_lea.vmem [#allocation1], 49
    %1004 = vst [vmem:[%s1003] ss:$2 sm:$0xff] %v965
    %v1005 = vld.sshfl [vmem:[#allocation1] sm:$0xff pattern:$0x75316420]
    %v1006 = vld.sshfl [vmem:[#allocation1 + $0x10] sm:$0xff pattern:$0x75316420]
    %v1007 = vld.sshfl [vmem:[#allocation1 + $0x20] sm:$0xff pattern:$0x75316420]
    %v1008 = vld.sshfl [vmem:[#allocation1 + $0x30] sm:$0xff pattern:$0x75316420]
    %1013 = vmatpush.msra.mxu0 %v981
    %1014 = vmatpush.msra.mxu0 %v980
    %1015 = vmatpush.msra.mxu0 %v979
    %1016 = vmatpush.msra.mxu0 %v978
    %1017 = vmatpush.msra.mxu0 %v977
    %1018 = vmatpush.msra.mxu0 %v976
    %1019 = vmatpush.msra.mxu0 %v975
    %1020 = vmatpush.msra.mxu0 %v974
    %1021 = vmatpush.msra.mxu0 %v973
    %1022 = vmatpush.msra.mxu0 %v972
    %1023 = vmatpush.msra.mxu0 %v971
    %1024 = vmatpush.msra.mxu0 %v970
    %1025 = vmatpush.msra.mxu0 %v969
    %1026 = vmatpush.msra.mxu0 %v968
    %1027 = vmatpush.msra.mxu0 %v967
    %1028 = vmatpush.msra.mxu0 %v966
    %1029 = vmatmul.f32.gmra.mxu0 %v1005
    %v1030 = vpop.f32.mrf.mxu0
    %v1031 = vadd.f32 0.0, %v1030
    %1032 = vmatmul.f32.gmra.mxu0 %v1006
    %v1033 = vpop.f32.mrf.mxu0
    %v1034 = vadd.f32 0.0, %v1033
    %1035 = vmatmul.f32.gmra.mxu0 %v1007
    %v1036 = vpop.f32.mrf.mxu0
    %v1037 = vadd.f32 0.0, %v1036
    %1038 = vmatmul.f32.gmra.mxu0 %v1008
    %v1039 = vpop.f32.mrf.mxu0
    %v1040 = vadd.f32 0.0, %v1039
    %1041 = vdwg.mxu0
    %v1042 = vadd.f32 %v954, %v1031
    %v1043 = vadd.f32 %v955, %v1034
    %v1044 = vadd.f32 %v956, %v1037
    %v1045 = vadd.f32 %v957, %v1040
    %v1046 = vld [vmem:[%s605 + $0x2] sm:$0xf]
    %v1047 = vld [vmem:[%s605 + $0xa] sm:$0xf]
    %v1048 = vld [vmem:[%s605 + $0x12] sm:$0xf]
    %v1049 = vld [vmem:[%s605 + $0x1a] sm:$0xf]
    %v1050 = vld [vmem:[%s605 + $0x32] sm:$0xf]
    %v1051 = vld [vmem:[%s605 + $0x3a] sm:$0xf]
    %v1052 = vld [vmem:[%s605 + $0x42] sm:$0xf]
    %v1053 = vld [vmem:[%s605 + $0x4a] sm:$0xf]
    %v1054 = vld [vmem:[#allocation8 + $0x280] sm:$0xff]
    %v1055 = vld [vmem:[#allocation8 + $0x288] sm:$0xff]
    %v1056 = vld [vmem:[#allocation8 + $0x290] sm:$0xff]
    %v1057 = vld [vmem:[#allocation8 + $0x298] sm:$0xff]
    %v1058 = vld [vmem:[#allocation8 + $0x2a0] sm:$0xff]
    %v1059 = vld [vmem:[#allocation8 + $0x2a8] sm:$0xff]
    %v1060 = vld [vmem:[#allocation8 + $0x2b0] sm:$0xff]
    %v1061 = vld [vmem:[#allocation8 + $0x2b8] sm:$0xff]
    %v1062 = vld [vmem:[#allocation8 + $0x2c0] sm:$0xff]
    %v1063 = vld [vmem:[#allocation8 + $0x2c8] sm:$0xff]
    %v1064 = vld [vmem:[#allocation8 + $0x2d0] sm:$0xff]
    %v1065 = vld [vmem:[#allocation8 + $0x2d8] sm:$0xff]
    %v1066 = vld [vmem:[#allocation8 + $0x2e0] sm:$0xff]
    %v1067 = vld [vmem:[#allocation8 + $0x2e8] sm:$0xff]
    %v1068 = vld [vmem:[#allocation8 + $0x2f0] sm:$0xff]
    %v1069 = vld [vmem:[#allocation8 + $0x2f8] sm:$0xff]
    %1078 = vst [vmem:[#allocation1] ss:$2 sm:$0xff] %v1046
    %s1079 = scalar_lea.vmem [#allocation1], 1
    %1080 = vst [vmem:[%s1079] ss:$2 sm:$0xff] %v1047
    %s1081 = scalar_lea.vmem [#allocation1], 16
    %1082 = vst [vmem:[%s1081] ss:$2 sm:$0xff] %v1048
    %s1083 = scalar_lea.vmem [#allocation1], 17
    %1084 = vst [vmem:[%s1083] ss:$2 sm:$0xff] %v1049
    %s1085 = scalar_lea.vmem [#allocation1], 32
    %1086 = vst [vmem:[%s1085] ss:$2 sm:$0xff] %v1050
    %s1087 = scalar_lea.vmem [#allocation1], 33
    %1088 = vst [vmem:[%s1087] ss:$2 sm:$0xff] %v1051
    %s1089 = scalar_lea.vmem [#allocation1], 48
    %1090 = vst [vmem:[%s1089] ss:$2 sm:$0xff] %v1052
    %s1091 = scalar_lea.vmem [#allocation1], 49
    %1092 = vst [vmem:[%s1091] ss:$2 sm:$0xff] %v1053
    %v1093 = vld.sshfl [vmem:[#allocation1] sm:$0xff pattern:$0x75316420]
    %v1094 = vld.sshfl [vmem:[#allocation1 + $0x10] sm:$0xff pattern:$0x75316420]
    %v1095 = vld.sshfl [vmem:[#allocation1 + $0x20] sm:$0xff pattern:$0x75316420]
    %v1096 = vld.sshfl [vmem:[#allocation1 + $0x30] sm:$0xff pattern:$0x75316420]
    %1101 = vmatpush.msra.mxu0 %v1069
    %1102 = vmatpush.msra.mxu0 %v1068
    %1103 = vmatpush.msra.mxu0 %v1067
    %1104 = vmatpush.msra.mxu0 %v1066
    %1105 = vmatpush.msra.mxu0 %v1065
    %1106 = vmatpush.msra.mxu0 %v1064
    %1107 = vmatpush.msra.mxu0 %v1063
    %1108 = vmatpush.msra.mxu0 %v1062
    %1109 = vmatpush.msra.mxu0 %v1061
    %1110 = vmatpush.msra.mxu0 %v1060
    %1111 = vmatpush.msra.mxu0 %v1059
    %1112 = vmatpush.msra.mxu0 %v1058
    %1113 = vmatpush.msra.mxu0 %v1057
    %1114 = vmatpush.msra.mxu0 %v1056
    %1115 = vmatpush.msra.mxu0 %v1055
    %1116 = vmatpush.msra.mxu0 %v1054
    %1117 = vmatmul.f32.gmra.mxu0 %v1093
    %v1118 = vpop.f32.mrf.mxu0
    %v1119 = vadd.f32 0.0, %v1118
    %1120 = vmatmul.f32.gmra.mxu0 %v1094
    %v1121 = vpop.f32.mrf.mxu0
    %v1122 = vadd.f32 0.0, %v1121
    %1123 = vmatmul.f32.gmra.mxu0 %v1095
    %v1124 = vpop.f32.mrf.mxu0
    %v1125 = vadd.f32 0.0, %v1124
    %1126 = vmatmul.f32.gmra.mxu0 %v1096
    %v1127 = vpop.f32.mrf.mxu0
    %v1128 = vadd.f32 0.0, %v1127
    %1129 = vdwg.mxu0
    %v1130 = vadd.f32 %v1042, %v1119
    %v1131 = vadd.f32 %v1043, %v1122
    %v1132 = vadd.f32 %v1044, %v1125
    %v1133 = vadd.f32 %v1045, %v1128
    %s1134 = scalar_lea.vmem [#allocation2], 16
    %v1135 = vld [vmem:[%s1134] sm:$0xf]
    %v1136 = vld [vmem:[%s1134 + $0x8] sm:$0xf]
    %v1137 = vld [vmem:[%s1134 + $0x10] sm:$0xf]
    %v1138 = vld [vmem:[%s1134 + $0x18] sm:$0xf]
    %v1139 = vld [vmem:[%s1134 + $0x30] sm:$0xf]
    %v1140 = vld [vmem:[%s1134 + $0x38] sm:$0xf]
    %v1141 = vld [vmem:[%s1134 + $0x40] sm:$0xf]
    %v1142 = vld [vmem:[%s1134 + $0x48] sm:$0xf]
    %v1143 = vld [vmem:[#allocation8 + $0x300] sm:$0xff]
    %v1144 = vld [vmem:[#allocation8 + $0x308] sm:$0xff]
    %v1145 = vld [vmem:[#allocation8 + $0x310] sm:$0xff]
    %v1146 = vld [vmem:[#allocation8 + $0x318] sm:$0xff]
    %v1147 = vld [vmem:[#allocation8 + $0x320] sm:$0xff]
    %v1148 = vld [vmem:[#allocation8 + $0x328] sm:$0xff]
    %v1149 = vld [vmem:[#allocation8 + $0x330] sm:$0xff]
    %v1150 = vld [vmem:[#allocation8 + $0x338] sm:$0xff]
    %v1151 = vld [vmem:[#allocation8 + $0x340] sm:$0xff]
    %v1152 = vld [vmem:[#allocation8 + $0x348] sm:$0xff]
    %v1153 = vld [vmem:[#allocation8 + $0x350] sm:$0xff]
    %v1154 = vld [vmem:[#allocation8 + $0x358] sm:$0xff]
    %v1155 = vld [vmem:[#allocation8 + $0x360] sm:$0xff]
    %v1156 = vld [vmem:[#allocation8 + $0x368] sm:$0xff]
    %v1157 = vld [vmem:[#allocation8 + $0x370] sm:$0xff]
    %v1158 = vld [vmem:[#allocation8 + $0x378] sm:$0xff]
    %1167 = vst [vmem:[#allocation1] ss:$2 sm:$0xff] %v1135
    %s1168 = scalar_lea.vmem [#allocation1], 1
    %1169 = vst [vmem:[%s1168] ss:$2 sm:$0xff] %v1136
    %s1170 = scalar_lea.vmem [#allocation1], 16
    %1171 = vst [vmem:[%s1170] ss:$2 sm:$0xff] %v1137
    %s1172 = scalar_lea.vmem [#allocation1], 17
    %1173 = vst [vmem:[%s1172] ss:$2 sm:$0xff] %v1138
    %s1174 = scalar_lea.vmem [#allocation1], 32
    %1175 = vst [vmem:[%s1174] ss:$2 sm:$0xff] %v1139
    %s1176 = scalar_lea.vmem [#allocation1], 33
    %1177 = vst [vmem:[%s1176] ss:$2 sm:$0xff] %v1140
    %s1178 = scalar_lea.vmem [#allocation1], 48
    %1179 = vst [vmem:[%s1178] ss:$2 sm:$0xff] %v1141
    %s1180 = scalar_lea.vmem [#allocation1], 49
    %1181 = vst [vmem:[%s1180] ss:$2 sm:$0xff] %v1142
    %v1182 = vld.sshfl [vmem:[#allocation1] sm:$0xff pattern:$0x75316420]
    %v1183 = vld.sshfl [vmem:[#allocation1 + $0x10] sm:$0xff pattern:$0x75316420]
    %v1184 = vld.sshfl [vmem:[#allocation1 + $0x20] sm:$0xff pattern:$0x75316420]
    %v1185 = vld.sshfl [vmem:[#allocation1 + $0x30] sm:$0xff pattern:$0x75316420]
    %1190 = vmatpush.msra.mxu0 %v1158
    %1191 = vmatpush.msra.mxu0 %v1157
    %1192 = vmatpush.msra.mxu0 %v1156
    %1193 = vmatpush.msra.mxu0 %v1155
    %1194 = vmatpush.msra.mxu0 %v1154
    %1195 = vmatpush.msra.mxu0 %v1153
    %1196 = vmatpush.msra.mxu0 %v1152
    %1197 = vmatpush.msra.mxu0 %v1151
    %1198 = vmatpush.msra.mxu0 %v1150
    %1199 = vmatpush.msra.mxu0 %v1149
    %1200 = vmatpush.msra.mxu0 %v1148
    %1201 = vmatpush.msra.mxu0 %v1147
    %1202 = vmatpush.msra.mxu0 %v1146
    %1203 = vmatpush.msra.mxu0 %v1145
    %1204 = vmatpush.msra.mxu0 %v1144
    %1205 = vmatpush.msra.mxu0 %v1143
    %1206 = vmatmul.f32.gmra.mxu0 %v1182
    %v1207 = vpop.f32.mrf.mxu0
    %v1208 = vadd.f32 0.0, %v1207
    %1209 = vmatmul.f32.gmra.mxu0 %v1183
    %v1210 = vpop.f32.mrf.mxu0
    %v1211 = vadd.f32 0.0, %v1210
    %1212 = vmatmul.f32.gmra.mxu0 %v1184
    %v1213 = vpop.f32.mrf.mxu0
    %v1214 = vadd.f32 0.0, %v1213
    %1215 = vmatmul.f32.gmra.mxu0 %v1185
    %v1216 = vpop.f32.mrf.mxu0
    %v1217 = vadd.f32 0.0, %v1216
    %1218 = vdwg.mxu0
    %v1219 = vadd.f32 %v1130, %v1208
    %v1220 = vadd.f32 %v1131, %v1211
    %v1221 = vadd.f32 %v1132, %v1214
    %v1222 = vadd.f32 %v1133, %v1217
    %v1223 = vld [vmem:[%s1134 + $0x1] sm:$0xf]
    %v1224 = vld [vmem:[%s1134 + $0x9] sm:$0xf]
    %v1225 = vld [vmem:[%s1134 + $0x11] sm:$0xf]
    %v1226 = vld [vmem:[%s1134 + $0x19] sm:$0xf]
    %v1227 = vld [vmem:[%s1134 + $0x31] sm:$0xf]
    %v1228 = vld [vmem:[%s1134 + $0x39] sm:$0xf]
    %v1229 = vld [vmem:[%s1134 + $0x41] sm:$0xf]
    %v1230 = vld [vmem:[%s1134 + $0x49] sm:$0xf]
    %v1231 = vld [vmem:[#allocation8 + $0x380] sm:$0xff]
    %v1232 = vld [vmem:[#allocation8 + $0x388] sm:$0xff]
    %v1233 = vld [vmem:[#allocation8 + $0x390] sm:$0xff]
    %v1234 = vld [vmem:[#allocation8 + $0x398] sm:$0xff]
    %v1235 = vld [vmem:[#allocation8 + $0x3a0] sm:$0xff]
    %v1236 = vld [vmem:[#allocation8 + $0x3a8] sm:$0xff]
    %v1237 = vld [vmem:[#allocation8 + $0x3b0] sm:$0xff]
    %v1238 = vld [vmem:[#allocation8 + $0x3b8] sm:$0xff]
    %v1239 = vld [vmem:[#allocation8 + $0x3c0] sm:$0xff]
    %v1240 = vld [vmem:[#allocation8 + $0x3c8] sm:$0xff]
    %v1241 = vld [vmem:[#allocation8 + $0x3d0] sm:$0xff]
    %v1242 = vld [vmem:[#allocation8 + $0x3d8] sm:$0xff]
    %v1243 = vld [vmem:[#allocation8 + $0x3e0] sm:$0xff]
    %v1244 = vld [vmem:[#allocation8 + $0x3e8] sm:$0xff]
    %v1245 = vld [vmem:[#allocation8 + $0x3f0] sm:$0xff]
    %v1246 = vld [vmem:[#allocation8 + $0x3f8] sm:$0xff]
    %1255 = vst [vmem:[#allocation1] ss:$2 sm:$0xff] %v1223
    %s1256 = scalar_lea.vmem [#allocation1], 1
    %1257 = vst [vmem:[%s1256] ss:$2 sm:$0xff] %v1224
    %s1258 = scalar_lea.vmem [#allocation1], 16
    %1259 = vst [vmem:[%s1258] ss:$2 sm:$0xff] %v1225
    %s1260 = scalar_lea.vmem [#allocation1], 17
    %1261 = vst [vmem:[%s1260] ss:$2 sm:$0xff] %v1226
    %s1262 = scalar_lea.vmem [#allocation1], 32
    %1263 = vst [vmem:[%s1262] ss:$2 sm:$0xff] %v1227
    %s1264 = scalar_lea.vmem [#allocation1], 33
    %1265 = vst [vmem:[%s1264] ss:$2 sm:$0xff] %v1228
    %s1266 = scalar_lea.vmem [#allocation1], 48
    %1267 = vst [vmem:[%s1266] ss:$2 sm:$0xff] %v1229
    %s1268 = scalar_lea.vmem [#allocation1], 49
    %1269 = vst [vmem:[%s1268] ss:$2 sm:$0xff] %v1230
    %v1270 = vld.sshfl [vmem:[#allocation1] sm:$0xff pattern:$0x75316420]
    %v1271 = vld.sshfl [vmem:[#allocation1 + $0x10] sm:$0xff pattern:$0x75316420]
    %v1272 = vld.sshfl [vmem:[#allocation1 + $0x20] sm:$0xff pattern:$0x75316420]
    %v1273 = vld.sshfl [vmem:[#allocation1 + $0x30] sm:$0xff pattern:$0x75316420]
    %1278 = vmatpush.msra.mxu0 %v1246
    %1279 = vmatpush.msra.mxu0 %v1245
    %1280 = vmatpush.msra.mxu0 %v1244
    %1281 = vmatpush.msra.mxu0 %v1243
    %1282 = vmatpush.msra.mxu0 %v1242
    %1283 = vmatpush.msra.mxu0 %v1241
    %1284 = vmatpush.msra.mxu0 %v1240
    %1285 = vmatpush.msra.mxu0 %v1239
    %1286 = vmatpush.msra.mxu0 %v1238
    %1287 = vmatpush.msra.mxu0 %v1237
    %1288 = vmatpush.msra.mxu0 %v1236
    %1289 = vmatpush.msra.mxu0 %v1235
    %1290 = vmatpush.msra.mxu0 %v1234
    %1291 = vmatpush.msra.mxu0 %v1233
    %1292 = vmatpush.msra.mxu0 %v1232
    %1293 = vmatpush.msra.mxu0 %v1231
    %1294 = vmatmul.f32.gmra.mxu0 %v1270
    %v1295 = vpop.f32.mrf.mxu0
    %v1296 = vadd.f32 0.0, %v1295
    %1297 = vmatmul.f32.gmra.mxu0 %v1271
    %v1298 = vpop.f32.mrf.mxu0
    %v1299 = vadd.f32 0.0, %v1298
    %1300 = vmatmul.f32.gmra.mxu0 %v1272
    %v1301 = vpop.f32.mrf.mxu0
    %v1302 = vadd.f32 0.0, %v1301
    %1303 = vmatmul.f32.gmra.mxu0 %v1273
    %v1304 = vpop.f32.mrf.mxu0
    %v1305 = vadd.f32 0.0, %v1304
    %1306 = vdwg.mxu0
    %v1307 = vadd.f32 %v1219, %v1296
    %v1308 = vadd.f32 %v1220, %v1299
    %v1309 = vadd.f32 %v1221, %v1302
    %v1310 = vadd.f32 %v1222, %v1305
    %v1311 = vld [vmem:[%s1134 + $0x2] sm:$0xf]
    %v1312 = vld [vmem:[%s1134 + $0xa] sm:$0xf]
    %v1313 = vld [vmem:[%s1134 + $0x12] sm:$0xf]
    %v1314 = vld [vmem:[%s1134 + $0x1a] sm:$0xf]
    %v1315 = vld [vmem:[%s1134 + $0x32] sm:$0xf]
    %v1316 = vld [vmem:[%s1134 + $0x3a] sm:$0xf]
    %v1317 = vld [vmem:[%s1134 + $0x42] sm:$0xf]
    %v1318 = vld [vmem:[%s1134 + $0x4a] sm:$0xf]
    %v1319 = vld [vmem:[#allocation8 + $0x400] sm:$0xff]
    %v1320 = vld [vmem:[#allocation8 + $0x408] sm:$0xff]
    %v1321 = vld [vmem:[#allocation8 + $0x410] sm:$0xff]
    %v1322 = vld [vmem:[#allocation8 + $0x418] sm:$0xff]
    %v1323 = vld [vmem:[#allocation8 + $0x420] sm:$0xff]
    %v1324 = vld [vmem:[#allocation8 + $0x428] sm:$0xff]
    %v1325 = vld [vmem:[#allocation8 + $0x430] sm:$0xff]
    %v1326 = vld [vmem:[#allocation8 + $0x438] sm:$0xff]
    %v1327 = vld [vmem:[#allocation8 + $0x440] sm:$0xff]
    %v1328 = vld [vmem:[#allocation8 + $0x448] sm:$0xff]
    %v1329 = vld [vmem:[#allocation8 + $0x450] sm:$0xff]
    %v1330 = vld [vmem:[#allocation8 + $0x458] sm:$0xff]
    %v1331 = vld [vmem:[#allocation8 + $0x460] sm:$0xff]
    %v1332 = vld [vmem:[#allocation8 + $0x468] sm:$0xff]
    %v1333 = vld [vmem:[#allocation8 + $0x470] sm:$0xff]
    %v1334 = vld [vmem:[#allocation8 + $0x478] sm:$0xff]
    %1343 = vst [vmem:[#allocation1] ss:$2 sm:$0xff] %v1311
    %s1344 = scalar_lea.vmem [#allocation1], 1
    %1345 = vst [vmem:[%s1344] ss:$2 sm:$0xff] %v1312
    %s1346 = scalar_lea.vmem [#allocation1], 16
    %1347 = vst [vmem:[%s1346] ss:$2 sm:$0xff] %v1313
    %s1348 = scalar_lea.vmem [#allocation1], 17
    %1349 = vst [vmem:[%s1348] ss:$2 sm:$0xff] %v1314
    %s1350 = scalar_lea.vmem [#allocation1], 32
    %1351 = vst [vmem:[%s1350] ss:$2 sm:$0xff] %v1315
    %s1352 = scalar_lea.vmem [#allocation1], 33
    %1353 = vst [vmem:[%s1352] ss:$2 sm:$0xff] %v1316
    %s1354 = scalar_lea.vmem [#allocation1], 48
    %1355 = vst [vmem:[%s1354] ss:$2 sm:$0xff] %v1317
    %s1356 = scalar_lea.vmem [#allocation1], 49
    %1357 = vst [vmem:[%s1356] ss:$2 sm:$0xff] %v1318
    %v1358 = vld.sshfl [vmem:[#allocation1] sm:$0xff pattern:$0x75316420]
    %v1359 = vld.sshfl [vmem:[#allocation1 + $0x10] sm:$0xff pattern:$0x75316420]
    %v1360 = vld.sshfl [vmem:[#allocation1 + $0x20] sm:$0xff pattern:$0x75316420]
    %v1361 = vld.sshfl [vmem:[#allocation1 + $0x30] sm:$0xff pattern:$0x75316420]
    %1366 = vmatpush.msra.mxu0 %v1334
    %1367 = vmatpush.msra.mxu0 %v1333
    %1368 = vmatpush.msra.mxu0 %v1332
    %1369 = vmatpush.msra.mxu0 %v1331
    %1370 = vmatpush.msra.mxu0 %v1330
    %1371 = vmatpush.msra.mxu0 %v1329
    %1372 = vmatpush.msra.mxu0 %v1328
    %1373 = vmatpush.msra.mxu0 %v1327
    %1374 = vmatpush.msra.mxu0 %v1326
    %1375 = vmatpush.msra.mxu0 %v1325
    %1376 = vmatpush.msra.mxu0 %v1324
    %1377 = vmatpush.msra.mxu0 %v1323
    %1378 = vmatpush.msra.mxu0 %v1322
    %1379 = vmatpush.msra.mxu0 %v1321
    %1380 = vmatpush.msra.mxu0 %v1320
    %1381 = vmatpush.msra.mxu0 %v1319
    %1382 = vmatmul.f32.gmra.mxu0 %v1358
    %v1383 = vpop.f32.mrf.mxu0
    %v1384 = vadd.f32 0.0, %v1383
    %1385 = vmatmul.f32.gmra.mxu0 %v1359
    %v1386 = vpop.f32.mrf.mxu0
    %v1387 = vadd.f32 0.0, %v1386
    %1388 = vmatmul.f32.gmra.mxu0 %v1360
    %v1389 = vpop.f32.mrf.mxu0
    %v1390 = vadd.f32 0.0, %v1389
    %1391 = vmatmul.f32.gmra.mxu0 %v1361
    %v1392 = vpop.f32.mrf.mxu0
    %v1393 = vadd.f32 0.0, %v1392
    %1394 = vdwg.mxu0
    %v1395 = vadd.f32 %v1307, %v1384
    %v1396 = vadd.f32 %v1308, %v1387
    %v1397 = vadd.f32 %v1309, %v1390
    %v1398 = vadd.f32 %v1310, %v1393
    %v1399 = vld [vmem:[%s4] sm:$0x1]
    %v1401 = vperm.slane %v1399, 0
    %v1403 = vadd.f32 %v1395, %v1401
    %v1404 = vadd.f32 %v1396, %v1401
    %v1405 = vadd.f32 %v1397, %v1401
    %v1406 = vadd.f32 %v1398, %v1401
    %v1407 = vmul.f32 %v1403, 0.2
    %v1408 = vmul.f32 %v1404, 0.2
    %v1409 = vmul.f32 %v1405, 0.2
    %v1410 = vmul.f32 %v1406, 0.2
    %v1411 = vmax.f32 %v1403, %v1407
    %v1412 = vmax.f32 %v1404, %v1408
    %v1413 = vmax.f32 %v1405, %v1409
    %v1414 = vmax.f32 %v1406, %v1410
    %v1415 = vmul.f32 %v1411, %v1411
    %v1416 = vmul.f32 %v1412, %v1412
    %v1417 = vmul.f32 %v1413, %v1413
    %v1418 = vmul.f32 %v1414, %v1414
    %1419 = vadd.xlane.f32.xlu0 %v1415
    %v1420 = vpop.xlane.xlu0 %1419
    %1421 = vadd.xlane.f32.xlu0 %v1416
    %v1422 = vpop.xlane.xlu0 %1421
    %1423 = vadd.xlane.f32.xlu0 %v1417
    %v1424 = vpop.xlane.xlu0 %1423
    %1425 = vadd.xlane.f32.xlu0 %v1418
    %v1426 = vpop.xlane.xlu0 %1425
    %v1427 = vmul.f32 %v1420, 0.0625
    %v1428 = vmul.f32 %v1422, 0.0625
    %v1429 = vmul.f32 %v1424, 0.0625
    %v1430 = vmul.f32 %v1426, 0.0625
    %v1431 = vadd.f32 %v1427, 1e-08
    %v1432 = vadd.f32 %v1428, 1e-08
    %v1433 = vadd.f32 %v1429, 1e-08
    %v1434 = vadd.f32 %v1430, 1e-08
    %v1435 = vrsqrt.pop %v1431
    %v1436 = vmul.f32 %v1435, %v1431
    %v1437 = vmul.f32 %v1436, %v1435
    %v1438 = vmul.f32 0.5, %v1437
    %v1439 = vsub.f32 1.5, %v1438
    %v1440 = vmul.f32 %v1435, %v1439
    %vm1441 = vweird.f32 %v1431
    %vm1442 = vweird.f32 %v1435
    %vm1443 = vmor %vm1441, %vm1442
    %v1444 = vsel %vm1443, %v1435, %v1440
    %v1445 = vrsqrt.pop %v1432
    %v1446 = vmul.f32 %v1445, %v1432
    %v1447 = vmul.f32 %v1446, %v1445
    %v1448 = vmul.f32 0.5, %v1447
    %v1449 = vsub.f32 1.5, %v1448
    %v1450 = vmul.f32 %v1445, %v1449
    %vm1451 = vweird.f32 %v1432
    %vm1452 = vweird.f32 %v1445
    %vm1453 = vmor %vm1451, %vm1452
    %v1454 = vsel %vm1453, %v1445, %v1450
    %v1455 = vrsqrt.pop %v1433
    %v1456 = vmul.f32 %v1455, %v1433
    %v1457 = vmul.f32 %v1456, %v1455
    %v1458 = vmul.f32 0.5, %v1457
    %v1459 = vsub.f32 1.5, %v1458
    %v1460 = vmul.f32 %v1455, %v1459
    %vm1461 = vweird.f32 %v1433
    %vm1462 = vweird.f32 %v1455
    %vm1463 = vmor %vm1461, %vm1462
    %v1464 = vsel %vm1463, %v1455, %v1460
    %v1465 = vrsqrt.pop %v1434
    %v1466 = vmul.f32 %v1465, %v1434
    %v1467 = vmul.f32 %v1466, %v1465
    %v1468 = vmul.f32 0.5, %v1467
    %v1469 = vsub.f32 1.5, %v1468
    %v1470 = vmul.f32 %v1465, %v1469
    %vm1471 = vweird.f32 %v1434
    %vm1472 = vweird.f32 %v1465
    %vm1473 = vmor %vm1471, %vm1472
    %v1474 = vsel %vm1473, %v1465, %v1470
    %v1475 = vmul.f32 %v1411, %v1444
    %v1476 = vmul.f32 %v1412, %v1454
    %v1477 = vmul.f32 %v1413, %v1464
    %v1478 = vmul.f32 %v1414, %v1474
    %v1483 = vrot.slane %v1475, 4
    %v1484 = vrot.slane %v1476, 4
    %v1485 = vrot.slane %v1477, 4
    %v1486 = vrot.slane %v1478, 4
    %1491 = vst [vmem:[#allocation9] sm:$0xf] %v1475
    %1492 = vst [vmem:[#allocation9 + $0x4] sm:$0xf] %v1483
    %1493 = vst [vmem:[#allocation9 + $0x8] sm:$0xf] %v1476
    %1494 = vst [vmem:[#allocation9 + $0xc] sm:$0xf] %v1484
    %1495 = vst [vmem:[#allocation9 + $0x10] sm:$0xf] %v1477
    %1496 = vst [vmem:[#allocation9 + $0x14] sm:$0xf] %v1485
    %1497 = vst [vmem:[#allocation9 + $0x18] sm:$0xf] %v1478
    %1498 = vst [vmem:[#allocation9 + $0x1c] sm:$0xf] %v1486
    // Predicated region
    $region34: #{tpu_custom_call.1} parent=1 // pred_check
      _
    $region35: #{tpu_custom_call.1} parent=1 // pred_check_branch
      %1500 = sbr.rel (0) target = $region37
    $region36: #{tpu_custom_call.1} parent=1 // pred_region
      %1502 = vsyncadd [#allocation5], 0
      %s1503 = sshll.u32 [#allocation9], 4
      %s1504 = int_to_ptr.vmem [resolvable:$true] %s1503
      %s1505 = sshll.u32 %s5, 4
      %s1506 = int_to_ptr.hbm [resolvable:$true] %s1505
      %1511 = dma.vmem_to_hbm [thread:$0]  %s1504, 512, %s1506, [#allocation5], 64, 64, 4
    $region37: #{tpu_custom_call.1} parent=1 // pred_fallthru
      _
    // Predicated region
    $region38: #{tpu_custom_call.1} parent=1 // pred_check
      _
    $region39: #{tpu_custom_call.1} parent=1 // pred_check_branch
      %1513 = sbr.rel (0) target = $region41
    $region40: #{tpu_custom_call.1} parent=1 // pred_region
      %1515 = dma.done [#allocation5], 512
    $region41: #{tpu_custom_call.1} parent=1 // pred_fallthru
      _
    %1516 = vsyncpa [#allocation4], 1
    %1517 = vsyncpa [#allocation7], 1
    %1518 = vsyncpa [#allocation5], 1

</llo_original>
